<compile_context>
chip_gen: v7x
topology: tpu7x:2x2x1
jax: 0.10.0
libtpu: 0.0.40
codegen_flags: <defaults>
</compile_context>

<pallas_src>
import functools
import math

import jax
import jax.numpy as jnp
from jax.experimental import pallas as pl
from jax.experimental.pallas import tpu as pltpu


def _round_up(x, m):
    return ((x + m - 1) // m) * m


def _vmem_limit_bytes():
    # v7x has only 64 MiB VMEM per TensorCore (v5e/v6e: 128 MiB); stay <= 48 MiB
    # everywhere so the scoped limit is always physically valid.
    try:
        cap = int(pltpu.get_tpu_info().vmem_capacity_bytes)
    except Exception:
        cap = 64 * 1024 * 1024
    return min(3 * cap // 4, 48 * 1024 * 1024)


_VMEM_LIMIT = _vmem_limit_bytes()
_COMPILER = functools.partial(pltpu.CompilerParams, vmem_limit_bytes=_VMEM_LIMIT)


# --------------------------------------------------------------------------
# Pallas kernels
# --------------------------------------------------------------------------

def _mm_fused_kernel(*refs, relu, has_residual):
    # Single full-K (tm, K) @ (K, tn) MXU pass, f32 accumulation; epilogue applies
    # folded-BN scale/bias, optional fused residual add and optional ReLU.
    if has_residual:
        x_ref, w_ref, s_ref, b_ref, r_ref, o_ref = refs
    else:
        x_ref, w_ref, s_ref, b_ref, o_ref = refs
        r_ref = None
    y = jnp.dot(x_ref[...], w_ref[...], preferred_element_type=jnp.float32)
    y = y * s_ref[...] + b_ref[...]
    if has_residual:
        y = y + r_ref[...].astype(jnp.float32)
    if relu:
        y = jnp.maximum(y, 0.0)
    o_ref[...] = y.astype(o_ref.dtype)


def _conv_tap_kernel(x_ref, w_ref, s_ref, b_ref, o_ref, *, kh, kw, wo, relu):
    # x_ref: (1, Hp, Wp, Cin) padded plane of one image (VMEM-resident across the
    #        whole inner (cout, ho) loop -> fetched from HBM exactly once per image).
    # w_ref: (kh*kw, Cin, tn) pre-packed taps; s/b: (1, tn); o_ref: (1, 1, wo, tn).
    # One grid step computes one output row; taps accumulate in f32.
    h = pl.program_id(2)
    tn = o_ref.shape[3]
    acc = jnp.zeros((wo, tn), jnp.float32)
    for di in range(kh):
        row = x_ref[0, pl.ds(h + di, 1), :, :][0]          # (Wp, Cin)
        for dj in range(kw):
            acc = acc + jnp.dot(row[dj:dj + wo, :], w_ref[di * kw + dj],
                                preferred_element_type=jnp.float32)
    y = acc * s_ref[...] + b_ref[...]
    if relu:
        y = jnp.maximum(y, 0.0)
    o_ref[0, 0] = y.astype(o_ref.dtype)


def _maxpool_kernel(p00_ref, p01_ref, p10_ref, p11_ref, o_ref, *, ho, wo):
    # 3x3 / stride-2 max pool on the phase-decomposed (-inf padded) plane of one
    # image: tap (di, dj) of the original window lives at phase (di%2, dj%2),
    # offset (di//2, dj//2).  Pure VPU maxes, no patch materialization.
    phases = (p00_ref, p01_ref, p10_ref, p11_ref)
    r = None
    for di in range(3):
        for dj in range(3):
            p = phases[(di % 2) * 2 + (dj % 2)]
            v = p[0, di // 2:di // 2 + ho, dj // 2:dj // 2 + wo, :]
            r = v if r is None else jnp.maximum(r, v)
    o_ref[0] = r


def _mean_kernel(x_ref, o_ref):
    # (N, H*W, C) -> f32 mean over the spatial axis (adaptive avg-pool to 1x1).
    o_ref[...] = jnp.mean(x_ref[...].astype(jnp.float32), axis=1)


# --------------------------------------------------------------------------
# Kernel wrappers
# --------------------------------------------------------------------------

@functools.partial(jax.jit, static_argnames=("relu", "out_dtype"))
def matmul_fused(x, w, scale, bias, residual=None, *, relu, out_dtype=jnp.bfloat16):
    """act((x @ w) * scale + bias [+ residual]) — single full-K pass per tile."""
    m, k = x.shape
    n = w.shape[1]
    # Tiles that divide the true M/N of this net (so no XLA pad/slice copies).
    tm = m if m <= 256 else 256
    tn = n if n <= 256 else 256
    # Expose >= 2 parallel blocks when possible so both v7x TensorCores get work.
    if pl.cdiv(m, tm) * pl.cdiv(n, tn) < 2:
        if tm % 16 == 0:
            tm //= 2
        elif tn % 256 == 0:
            tn //= 2
    mp = _round_up(m, tm)
    np_ = _round_up(n, tn)
    if mp != m:
        x = jnp.pad(x, ((0, mp - m), (0, 0)))
    if np_ != n:
        w = jnp.pad(w, ((0, 0), (0, np_ - n)))
        scale = jnp.pad(scale, ((0, 0), (0, np_ - n)))
        bias = jnp.pad(bias, ((0, 0), (0, np_ - n)))

    args = [x, w, scale, bias]
    in_specs = [
        pl.BlockSpec((tm, k), lambda i, j: (i, 0)),
        pl.BlockSpec((k, tn), lambda i, j: (0, j)),
        pl.BlockSpec((1, tn), lambda i, j: (0, j)),
        pl.BlockSpec((1, tn), lambda i, j: (0, j)),
    ]
    has_residual = residual is not None
    if has_residual:
        r = residual
        if mp != m or np_ != n:
            r = jnp.pad(r, ((0, mp - m), (0, np_ - n)))
        args.append(r)
        in_specs.append(pl.BlockSpec((tm, tn), lambda i, j: (i, j)))

    out = pl.pallas_call(
        functools.partial(_mm_fused_kernel, relu=relu, has_residual=has_residual),
        out_shape=jax.ShapeDtypeStruct((mp, np_), out_dtype),
        grid=(mp // tm, np_ // tn),
        in_specs=in_specs,
        out_specs=pl.BlockSpec((tm, tn), lambda i, j: (i, j)),
        compiler_params=_COMPILER(dimension_semantics=("parallel", "parallel")),
    )(*args)
    if mp != m or np_ != n:
        out = out[:m, :n]
    return out


@functools.partial(jax.jit,
                   static_argnames=("k", "stride", "pad", "kh", "kw", "relu"))
def _conv_tap_impl(x, w, scale, bias, *, k, stride, pad, kh, kw, relu):
    n, h, wid, c = x.shape
    ho = (h + 2 * pad - k) // stride + 1
    wo = (wid + 2 * pad - k) // stride + 1
    xp = jnp.pad(x, ((0, 0), (pad, pad), (pad, pad), (0, 0)))
    if stride == 2:
        # Space-to-depth: the stride-2 conv becomes a stride-1 (kh, kw) conv over
        # the 4*Cin phase channels (weights pre-packed to match at build time).
        hp, wp = xp.shape[1], xp.shape[2]
        xp = jnp.pad(xp, ((0, 0), (0, hp & 1), (0, wp & 1), (0, 0)))
        hp, wp = xp.shape[1], xp.shape[2]
        xp = xp.reshape(n, hp // 2, 2, wp // 2, 2, c)
        xp = jnp.transpose(xp, (0, 1, 3, 2, 4, 5)).reshape(n, hp // 2, wp // 2, 4 * c)

    n, hp, wp, cin = xp.shape
    taps, _, cout = w.shape
    tn = cout if cout <= 256 else 256

    return pl.pallas_call(
        functools.partial(_conv_tap_kernel, kh=kh, kw=kw, wo=wo, relu=relu),
        out_shape=jax.ShapeDtypeStruct((n, ho, wo, cout), jnp.bfloat16),
        grid=(n, cout // tn, ho),
        in_specs=[
            pl.BlockSpec((1, hp, wp, cin), lambda i, j, hh: (i, 0, 0, 0)),
            pl.BlockSpec((taps, cin, tn), lambda i, j, hh: (0, 0, j)),
            pl.BlockSpec((1, tn), lambda i, j, hh: (0, j)),
            pl.BlockSpec((1, tn), lambda i, j, hh: (0, j)),
        ],
        out_specs=pl.BlockSpec((1, 1, wo, tn), lambda i, j, hh: (i, hh, 0, j)),
        compiler_params=_COMPILER(
            dimension_semantics=("parallel", "parallel", "arbitrary")),
    )(xp, w, scale, bias)


@jax.jit
def maxpool_3x3_s2(x):
    n, h, w, c = x.shape
    xp = jnp.pad(x, ((0, 0), (1, 1), (1, 1), (0, 0)), constant_values=-jnp.inf)
    xp = jnp.pad(xp, ((0, 0), (0, xp.shape[1] & 1), (0, xp.shape[2] & 1), (0, 0)),
                 constant_values=-jnp.inf)
    ho = (h + 2 - 3) // 2 + 1
    wo = (w + 2 - 3) // 2 + 1
    phases = [xp[:, pi::2, pj::2, :] for pi in (0, 1) for pj in (0, 1)]
    hp2, wp2 = phases[0].shape[1], phases[0].shape[2]
    spec = pl.BlockSpec((1, hp2, wp2, c), lambda i: (i, 0, 0, 0))
    return pl.pallas_call(
        functools.partial(_maxpool_kernel, ho=ho, wo=wo),
        out_shape=jax.ShapeDtypeStruct((n, ho, wo, c), x.dtype),
        grid=(n,),
        in_specs=[spec, spec, spec, spec],
        out_specs=pl.BlockSpec((1, ho, wo, c), lambda i: (i, 0, 0, 0)),
        compiler_params=_COMPILER(dimension_semantics=("parallel",)),
    )(*phases)


@jax.jit
def global_avg_pool(x):
    n, h, w, c = x.shape
    x3 = x.reshape(n, h * w, c)
    return pl.pallas_call(
        _mean_kernel,
        out_shape=jax.ShapeDtypeStruct((n, c), jnp.float32),
        grid=(1,),
        in_specs=[pl.BlockSpec((n, h * w, c), lambda i: (0, 0, 0))],
        out_specs=pl.BlockSpec((n, c), lambda i: (0, 0)),
        compiler_params=_COMPILER(dimension_semantics=("arbitrary",)),
    )(x3)


# --------------------------------------------------------------------------
# JAX glue: conv+BN(+residual+ReLU) dispatch, bottleneck blocks
# --------------------------------------------------------------------------

def conv_tap(x, p, *, relu):
    return _conv_tap_impl(x, p["w"], p["scale"], p["bias"], k=p["k"],
                          stride=p["stride"], pad=p["pad"], kh=p["kh"],
                          kw=p["kw"], relu=relu)


def conv_bn(x, p, *, relu, residual=None):
    if p["kind"] == "mm":          # 1x1 conv -> pure matmul (stride via cheap slice)
        s = p["stride"]
        if s > 1:
            x = x[:, ::s, ::s, :]
        n, h, w, c = x.shape
        cout = p["w"].shape[1]
        m = n * h * w
        res2d = None if residual is None else residual.reshape(m, cout)
        y = matmul_fused(x.reshape(m, c), p["w"], p["scale"], p["bias"], res2d,
                         relu=relu)
        return y.reshape(n, h, w, cout)
    return conv_tap(x, p, relu=relu)


def bottleneck(x, bp):
    if "downsample" in bp:
        identity = conv_bn(x, bp["downsample"], relu=False)
    else:
        identity = x
    out = conv_bn(x, bp["conv1"], relu=True)
    out = conv_bn(out, bp["conv2"], relu=True)
    # Residual add + ReLU are fused into conv3's matmul epilogue.
    out = conv_bn(out, bp["conv3"], relu=True, residual=identity)
    return out


# --------------------------------------------------------------------------
# Deterministic synthetic parameters (ResNet50 backbone + custom classifier)
# --------------------------------------------------------------------------

def _make_conv_bn(key, cin, cout, k, stride):
    k1, k2, k3, k4, k5 = jax.random.split(key, 5)
    fan_in = cin * k * k
    w = jax.random.normal(k1, (cout, cin, k, k), jnp.float32) * math.sqrt(2.0 / fan_in)
    gamma = 1.0 + 0.1 * jax.random.normal(k2, (cout,), jnp.float32)
    beta = 0.1 * jax.random.normal(k3, (cout,), jnp.float32)
    running_mean = 0.1 * jax.random.normal(k4, (cout,), jnp.float32)
    running_var = 1.0 + 0.1 * jnp.abs(jax.random.normal(k5, (cout,), jnp.float32))
    # Eval-mode BatchNorm folded to per-channel scale / bias (f32).
    scale = gamma / jnp.sqrt(running_var + 1e-5)
    bias = beta - running_mean * scale
    p = {"scale": scale.reshape(1, cout), "bias": bias.reshape(1, cout),
         "stride": stride, "k": k}
    if k == 1:
        p["kind"] = "mm"
        p["w"] = jnp.transpose(w.reshape(cout, cin)).astype(jnp.bfloat16)  # (Cin, Cout)
    else:
        p["kind"] = "tap"
        p["pad"] = k // 2
        wt = jnp.transpose(w, (2, 3, 1, 0))                 # (k, k, Cin, Cout)
        if stride == 1:
            p["kh"] = p["kw"] = k
            p["w"] = wt.reshape(k * k, cin, cout).astype(jnp.bfloat16)
        else:
            # Pack for the space-to-depth (stride-1 equivalent) form:
            # tap (oi, oj) over 4*Cin phase channels ordered (pi, pj, c).
            k2_ = (k + 1) // 2
            wt = jnp.pad(wt, ((0, 2 * k2_ - k), (0, 2 * k2_ - k), (0, 0), (0, 0)))
            wt = wt.reshape(k2_, 2, k2_, 2, cin, cout)
            wt = jnp.transpose(wt, (0, 2, 1, 3, 4, 5)).reshape(k2_ * k2_, 4 * cin, cout)
            p["kh"] = p["kw"] = k2_
            p["w"] = wt.astype(jnp.bfloat16)
    return p


def make_resnet_model_params(key, num_classes=2):
    keys = iter(jax.random.split(key, 256))
    params = {"conv1": _make_conv_bn(next(keys), 3, 64, 7, stride=2),
              "num_classes": num_classes}

    layer_cfg = [(3, 64, 1), (4, 128, 2), (6, 256, 2), (3, 512, 2)]  # ResNet50
    in_ch = 64
    layers = []
    for nblocks, width, stride in layer_cfg:
        blocks = []
        for b in range(nblocks):
            s = stride if b == 0 else 1
            bp = {
                "conv1": _make_conv_bn(next(keys), in_ch, width, 1, stride=1),
                "conv2": _make_conv_bn(next(keys), width, width, 3, stride=s),
                "conv3": _make_conv_bn(next(keys), width, width * 4, 1, stride=1),
            }
            if b == 0:  # projection shortcut (channel change and/or stride)
                bp["downsample"] = _make_conv_bn(next(keys), in_ch, width * 4, 1,
                                                 stride=s)
            blocks.append(bp)
            in_ch = width * 4
        layers.append(blocks)
    params["layers"] = layers

    feature_dim = 2048
    k1, k2, k3, k4 = jax.random.split(next(keys), 4)
    b1 = 1.0 / math.sqrt(feature_dim)
    b2 = 1.0 / math.sqrt(256)
    params["fc1_w"] = jax.random.uniform(k1, (feature_dim, 256), jnp.float32, -b1, b1)
    params["fc1_b"] = jax.random.uniform(k2, (1, 256), jnp.float32, -b1, b1)
    # fc2 pre-padded to 128 output lanes once at build time (lane-dense stores);
    # the (num_classes) logits are sliced back at the very end.
    nc_pad = 128
    w2 = jax.random.uniform(k3, (256, num_classes), jnp.float32, -b2, b2)
    bv2 = jax.random.uniform(k4, (num_classes,), jnp.float32, -b2, b2)
    params["fc2_w"] = jnp.pad(w2, ((0, 0), (0, nc_pad - num_classes)))
    params["fc2_b"] = jnp.pad(bv2, (0, nc_pad - num_classes)).reshape(1, nc_pad)
    params["ones_fc1"] = jnp.ones((1, 256), jnp.float32)
    params["ones_fc2"] = jnp.ones((1, nc_pad), jnp.float32)
    return params


# --------------------------------------------------------------------------
# Forward pass (ResNetModel.forward): backbone -> classifier
# --------------------------------------------------------------------------

def resnet_model_forward(params, x_nchw):
    # NCHW -> NHWC, bf16 activations (MXU-native); accumulation stays f32 in-kernel.
    x = jnp.transpose(x_nchw, (0, 2, 3, 1)).astype(jnp.bfloat16)

    # Stem: conv7x7/s2 + BN + ReLU (space-to-depth tap kernel), then maxpool 3x3/s2.
    x = conv_bn(x, params["conv1"], relu=True)
    x = maxpool_3x3_s2(x)

    # Four bottleneck stages.
    for blocks in params["layers"]:
        for bp in blocks:
            x = bottleneck(x, bp)

    # Adaptive average pool to 1x1 + flatten -> (N, 2048) f32.
    feats = global_avg_pool(x)

    # Classifier (Dropout = identity in eval mode); kept in f32 to match nn.Linear.
    h1 = matmul_fused(feats, params["fc1_w"], params["ones_fc1"], params["fc1_b"],
                      relu=True, out_dtype=jnp.float32)
    y = matmul_fused(h1, params["fc2_w"], params["ones_fc2"], params["fc2_b"],
                     relu=False, out_dtype=jnp.float32)
    return y[:, :params["num_classes"]]


if __name__ == "__main__":
    key = jax.random.PRNGKey(0)
    pkey, xkey = jax.random.split(key)
    params = make_resnet_model_params(pkey, num_classes=2)
    # Small but structurally valid input: 32x32 spatial -> 1x1 after layer4.
    x = jax.random.normal(xkey, (2, 3, 32, 32), jnp.float32)
    logits = resnet_model_forward(params, x)
    logits = jax.block_until_ready(logits)
    assert logits.shape == (2, 2) and logits.dtype == jnp.float32
    print("KERNEL_OK")
</pallas_src>

<mosaic_0001>
module attributes {stable_mosaic.version = 11 : i64} {
  func.func @_conv_tap_kernel(%arg0: i32, %arg1: i32, %arg2: i32, %arg3: memref<1x19x19x12xbf16, #tpu.memory_space<vmem>>, %arg4: memref<16x12x64xbf16, #tpu.memory_space<vmem>>, %arg5: memref<1x64xf32, #tpu.memory_space<vmem>>, %arg6: memref<1x64xf32, #tpu.memory_space<vmem>>, %arg7: memref<1x1x16x64xbf16, #tpu.memory_space<vmem>>) attributes {dimension_semantics = [#tpu.dimension_semantics<parallel>, #tpu.dimension_semantics<parallel>, #tpu.dimension_semantics<arbitrary>], iteration_bounds = array<i64: 2, 1, 16>, scalar_prefetch = 0 : i64, scratch_operands = 0 : i64, tpu.core_type = #tpu.core_type<tc>, window_params = [{transform_indices = @transform_0, window_bounds = array<i64: 1, 19, 19, 12>}, {transform_indices = @transform_1, window_bounds = array<i64: 16, 12, 64>}, {transform_indices = @transform_2, window_bounds = array<i64: 1, 64>}, {transform_indices = @transform_3, window_bounds = array<i64: 1, 64>}, {transform_indices = @transform_4, window_bounds = array<i64: 1, 1, 16, 64>}]} {
    %cst = arith.constant 0.000000e+00 : f32
    %0 = vector.broadcast %cst : f32 to vector<16x64xf32>
    %c0_i32 = arith.constant 0 : i32
    %1 = arith.addi %arg2, %c0_i32 : i32
    %c0 = arith.constant 0 : index
    %2 = arith.index_cast %1 : i32 to index
    %c0_0 = arith.constant 0 : index
    %c0_1 = arith.constant 0 : index
    %3 = vector.load %arg3[%c0, %2, %c0_0, %c0_1] : memref<1x19x19x12xbf16, #tpu.memory_space<vmem>>, vector<1x1x19x12xbf16>
    %4 = vector.shape_cast %3 : vector<1x1x19x12xbf16> to vector<1x19x12xbf16>
    %5 = vector.shape_cast %4 : vector<1x19x12xbf16> to vector<19x12xbf16>
    %6 = vector.extract_strided_slice %5 {offsets = [0, 0], sizes = [16, 12], strides = [1, 1]} : vector<19x12xbf16> to vector<16x12xbf16>
    %c0_2 = arith.constant 0 : index
    %c0_3 = arith.constant 0 : index
    %c0_4 = arith.constant 0 : index
    %7 = vector.load %arg4[%c0_2, %c0_3, %c0_4] : memref<16x12x64xbf16, #tpu.memory_space<vmem>>, vector<1x12x64xbf16>
    %8 = vector.shape_cast %7 : vector<1x12x64xbf16> to vector<12x64xbf16>
    %cst_5 = arith.constant dense<0.000000e+00> : vector<16x64xf32>
    %9 = tpu.matmul %6, %8, %cst_5 {dimension_numbers = #tpu.dot_dimension_numbers<[1], [0], [0], [1], [0, 0, 1, 1], [], []>} : vector<16x12xbf16>, vector<12x64xbf16>, vector<16x64xf32> -> vector<16x64xf32>
    %10 = arith.addf %0, %9 : vector<16x64xf32>
    %11 = vector.extract_strided_slice %5 {offsets = [1, 0], sizes = [16, 12], strides = [1, 1]} : vector<19x12xbf16> to vector<16x12xbf16>
    %c1 = arith.constant 1 : index
    %c0_6 = arith.constant 0 : index
    %c0_7 = arith.constant 0 : index
    %12 = vector.load %arg4[%c1, %c0_6, %c0_7] : memref<16x12x64xbf16, #tpu.memory_space<vmem>>, vector<1x12x64xbf16>
    %13 = vector.shape_cast %12 : vector<1x12x64xbf16> to vector<12x64xbf16>
    %cst_8 = arith.constant dense<0.000000e+00> : vector<16x64xf32>
    %14 = tpu.matmul %11, %13, %cst_8 {dimension_numbers = #tpu.dot_dimension_numbers<[1], [0], [0], [1], [0, 0, 1, 1], [], []>} : vector<16x12xbf16>, vector<12x64xbf16>, vector<16x64xf32> -> vector<16x64xf32>
    %15 = arith.addf %10, %14 : vector<16x64xf32>
    %16 = vector.extract_strided_slice %5 {offsets = [2, 0], sizes = [16, 12], strides = [1, 1]} : vector<19x12xbf16> to vector<16x12xbf16>
    %c2 = arith.constant 2 : index
    %c0_9 = arith.constant 0 : index
    %c0_10 = arith.constant 0 : index
    %17 = vector.load %arg4[%c2, %c0_9, %c0_10] : memref<16x12x64xbf16, #tpu.memory_space<vmem>>, vector<1x12x64xbf16>
    %18 = vector.shape_cast %17 : vector<1x12x64xbf16> to vector<12x64xbf16>
    %cst_11 = arith.constant dense<0.000000e+00> : vector<16x64xf32>
    %19 = tpu.matmul %16, %18, %cst_11 {dimension_numbers = #tpu.dot_dimension_numbers<[1], [0], [0], [1], [0, 0, 1, 1], [], []>} : vector<16x12xbf16>, vector<12x64xbf16>, vector<16x64xf32> -> vector<16x64xf32>
    %20 = arith.addf %15, %19 : vector<16x64xf32>
    %21 = vector.extract_strided_slice %5 {offsets = [3, 0], sizes = [16, 12], strides = [1, 1]} : vector<19x12xbf16> to vector<16x12xbf16>
    %c3 = arith.constant 3 : index
    %c0_12 = arith.constant 0 : index
    %c0_13 = arith.constant 0 : index
    %22 = vector.load %arg4[%c3, %c0_12, %c0_13] : memref<16x12x64xbf16, #tpu.memory_space<vmem>>, vector<1x12x64xbf16>
    %23 = vector.shape_cast %22 : vector<1x12x64xbf16> to vector<12x64xbf16>
    %cst_14 = arith.constant dense<0.000000e+00> : vector<16x64xf32>
    %24 = tpu.matmul %21, %23, %cst_14 {dimension_numbers = #tpu.dot_dimension_numbers<[1], [0], [0], [1], [0, 0, 1, 1], [], []>} : vector<16x12xbf16>, vector<12x64xbf16>, vector<16x64xf32> -> vector<16x64xf32>
    %25 = arith.addf %20, %24 : vector<16x64xf32>
    %c1_i32 = arith.constant 1 : i32
    %26 = arith.addi %arg2, %c1_i32 : i32
    %c0_15 = arith.constant 0 : index
    %27 = arith.index_cast %26 : i32 to index
    %c0_16 = arith.constant 0 : index
    %c0_17 = arith.constant 0 : index
    %28 = vector.load %arg3[%c0_15, %27, %c0_16, %c0_17] : memref<1x19x19x12xbf16, #tpu.memory_space<vmem>>, vector<1x1x19x12xbf16>
    %29 = vector.shape_cast %28 : vector<1x1x19x12xbf16> to vector<1x19x12xbf16>
    %30 = vector.shape_cast %29 : vector<1x19x12xbf16> to vector<19x12xbf16>
    %31 = vector.extract_strided_slice %30 {offsets = [0, 0], sizes = [16, 12], strides = [1, 1]} : vector<19x12xbf16> to vector<16x12xbf16>
    %c4 = arith.constant 4 : index
    %c0_18 = arith.constant 0 : index
    %c0_19 = arith.constant 0 : index
    %32 = vector.load %arg4[%c4, %c0_18, %c0_19] : memref<16x12x64xbf16, #tpu.memory_space<vmem>>, vector<1x12x64xbf16>
    %33 = vector.shape_cast %32 : vector<1x12x64xbf16> to vector<12x64xbf16>
    %cst_20 = arith.constant dense<0.000000e+00> : vector<16x64xf32>
    %34 = tpu.matmul %31, %33, %cst_20 {dimension_numbers = #tpu.dot_dimension_numbers<[1], [0], [0], [1], [0, 0, 1, 1], [], []>} : vector<16x12xbf16>, vector<12x64xbf16>, vector<16x64xf32> -> vector<16x64xf32>
    %35 = arith.addf %25, %34 : vector<16x64xf32>
    %36 = vector.extract_strided_slice %30 {offsets = [1, 0], sizes = [16, 12], strides = [1, 1]} : vector<19x12xbf16> to vector<16x12xbf16>
    %c5 = arith.constant 5 : index
    %c0_21 = arith.constant 0 : index
    %c0_22 = arith.constant 0 : index
    %37 = vector.load %arg4[%c5, %c0_21, %c0_22] : memref<16x12x64xbf16, #tpu.memory_space<vmem>>, vector<1x12x64xbf16>
    %38 = vector.shape_cast %37 : vector<1x12x64xbf16> to vector<12x64xbf16>
    %cst_23 = arith.constant dense<0.000000e+00> : vector<16x64xf32>
    %39 = tpu.matmul %36, %38, %cst_23 {dimension_numbers = #tpu.dot_dimension_numbers<[1], [0], [0], [1], [0, 0, 1, 1], [], []>} : vector<16x12xbf16>, vector<12x64xbf16>, vector<16x64xf32> -> vector<16x64xf32>
    %40 = arith.addf %35, %39 : vector<16x64xf32>
    %41 = vector.extract_strided_slice %30 {offsets = [2, 0], sizes = [16, 12], strides = [1, 1]} : vector<19x12xbf16> to vector<16x12xbf16>
    %c6 = arith.constant 6 : index
    %c0_24 = arith.constant 0 : index
    %c0_25 = arith.constant 0 : index
    %42 = vector.load %arg4[%c6, %c0_24, %c0_25] : memref<16x12x64xbf16, #tpu.memory_space<vmem>>, vector<1x12x64xbf16>
    %43 = vector.shape_cast %42 : vector<1x12x64xbf16> to vector<12x64xbf16>
    %cst_26 = arith.constant dense<0.000000e+00> : vector<16x64xf32>
    %44 = tpu.matmul %41, %43, %cst_26 {dimension_numbers = #tpu.dot_dimension_numbers<[1], [0], [0], [1], [0, 0, 1, 1], [], []>} : vector<16x12xbf16>, vector<12x64xbf16>, vector<16x64xf32> -> vector<16x64xf32>
    %45 = arith.addf %40, %44 : vector<16x64xf32>
    %46 = vector.extract_strided_slice %30 {offsets = [3, 0], sizes = [16, 12], strides = [1, 1]} : vector<19x12xbf16> to vector<16x12xbf16>
    %c7 = arith.constant 7 : index
    %c0_27 = arith.constant 0 : index
    %c0_28 = arith.constant 0 : index
    %47 = vector.load %arg4[%c7, %c0_27, %c0_28] : memref<16x12x64xbf16, #tpu.memory_space<vmem>>, vector<1x12x64xbf16>
    %48 = vector.shape_cast %47 : vector<1x12x64xbf16> to vector<12x64xbf16>
    %cst_29 = arith.constant dense<0.000000e+00> : vector<16x64xf32>
    %49 = tpu.matmul %46, %48, %cst_29 {dimension_numbers = #tpu.dot_dimension_numbers<[1], [0], [0], [1], [0, 0, 1, 1], [], []>} : vector<16x12xbf16>, vector<12x64xbf16>, vector<16x64xf32> -> vector<16x64xf32>
    %50 = arith.addf %45, %49 : vector<16x64xf32>
    %c2_i32 = arith.constant 2 : i32
    %51 = arith.addi %arg2, %c2_i32 : i32
    %c0_30 = arith.constant 0 : index
    %52 = arith.index_cast %51 : i32 to index
    %c0_31 = arith.constant 0 : index
    %c0_32 = arith.constant 0 : index
    %53 = vector.load %arg3[%c0_30, %52, %c0_31, %c0_32] : memref<1x19x19x12xbf16, #tpu.memory_space<vmem>>, vector<1x1x19x12xbf16>
    %54 = vector.shape_cast %53 : vector<1x1x19x12xbf16> to vector<1x19x12xbf16>
    %55 = vector.shape_cast %54 : vector<1x19x12xbf16> to vector<19x12xbf16>
    %56 = vector.extract_strided_slice %55 {offsets = [0, 0], sizes = [16, 12], strides = [1, 1]} : vector<19x12xbf16> to vector<16x12xbf16>
    %c8 = arith.constant 8 : index
    %c0_33 = arith.constant 0 : index
    %c0_34 = arith.constant 0 : index
    %57 = vector.load %arg4[%c8, %c0_33, %c0_34] : memref<16x12x64xbf16, #tpu.memory_space<vmem>>, vector<1x12x64xbf16>
    %58 = vector.shape_cast %57 : vector<1x12x64xbf16> to vector<12x64xbf16>
    %cst_35 = arith.constant dense<0.000000e+00> : vector<16x64xf32>
    %59 = tpu.matmul %56, %58, %cst_35 {dimension_numbers = #tpu.dot_dimension_numbers<[1], [0], [0], [1], [0, 0, 1, 1], [], []>} : vector<16x12xbf16>, vector<12x64xbf16>, vector<16x64xf32> -> vector<16x64xf32>
    %60 = arith.addf %50, %59 : vector<16x64xf32>
    %61 = vector.extract_strided_slice %55 {offsets = [1, 0], sizes = [16, 12], strides = [1, 1]} : vector<19x12xbf16> to vector<16x12xbf16>
    %c9 = arith.constant 9 : index
    %c0_36 = arith.constant 0 : index
    %c0_37 = arith.constant 0 : index
    %62 = vector.load %arg4[%c9, %c0_36, %c0_37] : memref<16x12x64xbf16, #tpu.memory_space<vmem>>, vector<1x12x64xbf16>
    %63 = vector.shape_cast %62 : vector<1x12x64xbf16> to vector<12x64xbf16>
    %cst_38 = arith.constant dense<0.000000e+00> : vector<16x64xf32>
    %64 = tpu.matmul %61, %63, %cst_38 {dimension_numbers = #tpu.dot_dimension_numbers<[1], [0], [0], [1], [0, 0, 1, 1], [], []>} : vector<16x12xbf16>, vector<12x64xbf16>, vector<16x64xf32> -> vector<16x64xf32>
    %65 = arith.addf %60, %64 : vector<16x64xf32>
    %66 = vector.extract_strided_slice %55 {offsets = [2, 0], sizes = [16, 12], strides = [1, 1]} : vector<19x12xbf16> to vector<16x12xbf16>
    %c10 = arith.constant 10 : index
    %c0_39 = arith.constant 0 : index
    %c0_40 = arith.constant 0 : index
    %67 = vector.load %arg4[%c10, %c0_39, %c0_40] : memref<16x12x64xbf16, #tpu.memory_space<vmem>>, vector<1x12x64xbf16>
    %68 = vector.shape_cast %67 : vector<1x12x64xbf16> to vector<12x64xbf16>
    %cst_41 = arith.constant dense<0.000000e+00> : vector<16x64xf32>
    %69 = tpu.matmul %66, %68, %cst_41 {dimension_numbers = #tpu.dot_dimension_numbers<[1], [0], [0], [1], [0, 0, 1, 1], [], []>} : vector<16x12xbf16>, vector<12x64xbf16>, vector<16x64xf32> -> vector<16x64xf32>
    %70 = arith.addf %65, %69 : vector<16x64xf32>
    %71 = vector.extract_strided_slice %55 {offsets = [3, 0], sizes = [16, 12], strides = [1, 1]} : vector<19x12xbf16> to vector<16x12xbf16>
    %c11 = arith.constant 11 : index
    %c0_42 = arith.constant 0 : index
    %c0_43 = arith.constant 0 : index
    %72 = vector.load %arg4[%c11, %c0_42, %c0_43] : memref<16x12x64xbf16, #tpu.memory_space<vmem>>, vector<1x12x64xbf16>
    %73 = vector.shape_cast %72 : vector<1x12x64xbf16> to vector<12x64xbf16>
    %cst_44 = arith.constant dense<0.000000e+00> : vector<16x64xf32>
    %74 = tpu.matmul %71, %73, %cst_44 {dimension_numbers = #tpu.dot_dimension_numbers<[1], [0], [0], [1], [0, 0, 1, 1], [], []>} : vector<16x12xbf16>, vector<12x64xbf16>, vector<16x64xf32> -> vector<16x64xf32>
    %75 = arith.addf %70, %74 : vector<16x64xf32>
    %c3_i32 = arith.constant 3 : i32
    %76 = arith.addi %arg2, %c3_i32 : i32
    %c0_45 = arith.constant 0 : index
    %77 = arith.index_cast %76 : i32 to index
    %c0_46 = arith.constant 0 : index
    %c0_47 = arith.constant 0 : index
    %78 = vector.load %arg3[%c0_45, %77, %c0_46, %c0_47] : memref<1x19x19x12xbf16, #tpu.memory_space<vmem>>, vector<1x1x19x12xbf16>
    %79 = vector.shape_cast %78 : vector<1x1x19x12xbf16> to vector<1x19x12xbf16>
    %80 = vector.shape_cast %79 : vector<1x19x12xbf16> to vector<19x12xbf16>
    %81 = vector.extract_strided_slice %80 {offsets = [0, 0], sizes = [16, 12], strides = [1, 1]} : vector<19x12xbf16> to vector<16x12xbf16>
    %c12 = arith.constant 12 : index
    %c0_48 = arith.constant 0 : index
    %c0_49 = arith.constant 0 : index
    %82 = vector.load %arg4[%c12, %c0_48, %c0_49] : memref<16x12x64xbf16, #tpu.memory_space<vmem>>, vector<1x12x64xbf16>
    %83 = vector.shape_cast %82 : vector<1x12x64xbf16> to vector<12x64xbf16>
    %cst_50 = arith.constant dense<0.000000e+00> : vector<16x64xf32>
    %84 = tpu.matmul %81, %83, %cst_50 {dimension_numbers = #tpu.dot_dimension_numbers<[1], [0], [0], [1], [0, 0, 1, 1], [], []>} : vector<16x12xbf16>, vector<12x64xbf16>, vector<16x64xf32> -> vector<16x64xf32>
    %85 = arith.addf %75, %84 : vector<16x64xf32>
    %86 = vector.extract_strided_slice %80 {offsets = [1, 0], sizes = [16, 12], strides = [1, 1]} : vector<19x12xbf16> to vector<16x12xbf16>
    %c13 = arith.constant 13 : index
    %c0_51 = arith.constant 0 : index
    %c0_52 = arith.constant 0 : index
    %87 = vector.load %arg4[%c13, %c0_51, %c0_52] : memref<16x12x64xbf16, #tpu.memory_space<vmem>>, vector<1x12x64xbf16>
    %88 = vector.shape_cast %87 : vector<1x12x64xbf16> to vector<12x64xbf16>
    %cst_53 = arith.constant dense<0.000000e+00> : vector<16x64xf32>
    %89 = tpu.matmul %86, %88, %cst_53 {dimension_numbers = #tpu.dot_dimension_numbers<[1], [0], [0], [1], [0, 0, 1, 1], [], []>} : vector<16x12xbf16>, vector<12x64xbf16>, vector<16x64xf32> -> vector<16x64xf32>
    %90 = arith.addf %85, %89 : vector<16x64xf32>
    %91 = vector.extract_strided_slice %80 {offsets = [2, 0], sizes = [16, 12], strides = [1, 1]} : vector<19x12xbf16> to vector<16x12xbf16>
    %c14 = arith.constant 14 : index
    %c0_54 = arith.constant 0 : index
    %c0_55 = arith.constant 0 : index
    %92 = vector.load %arg4[%c14, %c0_54, %c0_55] : memref<16x12x64xbf16, #tpu.memory_space<vmem>>, vector<1x12x64xbf16>
    %93 = vector.shape_cast %92 : vector<1x12x64xbf16> to vector<12x64xbf16>
    %cst_56 = arith.constant dense<0.000000e+00> : vector<16x64xf32>
    %94 = tpu.matmul %91, %93, %cst_56 {dimension_numbers = #tpu.dot_dimension_numbers<[1], [0], [0], [1], [0, 0, 1, 1], [], []>} : vector<16x12xbf16>, vector<12x64xbf16>, vector<16x64xf32> -> vector<16x64xf32>
    %95 = arith.addf %90, %94 : vector<16x64xf32>
    %96 = vector.extract_strided_slice %80 {offsets = [3, 0], sizes = [16, 12], strides = [1, 1]} : vector<19x12xbf16> to vector<16x12xbf16>
    %c15 = arith.constant 15 : index
    %c0_57 = arith.constant 0 : index
    %c0_58 = arith.constant 0 : index
    %97 = vector.load %arg4[%c15, %c0_57, %c0_58] : memref<16x12x64xbf16, #tpu.memory_space<vmem>>, vector<1x12x64xbf16>
    %98 = vector.shape_cast %97 : vector<1x12x64xbf16> to vector<12x64xbf16>
    %cst_59 = arith.constant dense<0.000000e+00> : vector<16x64xf32>
    %99 = tpu.matmul %96, %98, %cst_59 {dimension_numbers = #tpu.dot_dimension_numbers<[1], [0], [0], [1], [0, 0, 1, 1], [], []>} : vector<16x12xbf16>, vector<12x64xbf16>, vector<16x64xf32> -> vector<16x64xf32>
    %100 = arith.addf %95, %99 : vector<16x64xf32>
    %c0_60 = arith.constant 0 : index
    %c0_61 = arith.constant 0 : index
    %101 = vector.load %arg5[%c0_60, %c0_61] : memref<1x64xf32, #tpu.memory_space<vmem>>, vector<1x64xf32>
    %102 = vector.broadcast %101 : vector<1x64xf32> to vector<16x64xf32>
    %103 = arith.mulf %100, %102 : vector<16x64xf32>
    %c0_62 = arith.constant 0 : index
    %c0_63 = arith.constant 0 : index
    %104 = vector.load %arg6[%c0_62, %c0_63] : memref<1x64xf32, #tpu.memory_space<vmem>>, vector<1x64xf32>
    %105 = vector.broadcast %104 : vector<1x64xf32> to vector<16x64xf32>
    %106 = arith.addf %103, %105 : vector<16x64xf32>
    %cst_64 = arith.constant 0.000000e+00 : f32
    %107 = vector.broadcast %cst_64 : f32 to vector<16x64xf32>
    %108 = arith.maximumf %106, %107 : vector<16x64xf32>
    %109 = arith.truncf %108 : vector<16x64xf32> to vector<16x64xbf16>
    %c0_65 = arith.constant 0 : index
    %c0_66 = arith.constant 0 : index
    %c0_67 = arith.constant 0 : index
    %c0_68 = arith.constant 0 : index
    %110 = vector.load %arg7[%c0_65, %c0_66, %c0_67, %c0_68] : memref<1x1x16x64xbf16, #tpu.memory_space<vmem>>, vector<1x1x16x64xbf16>
    %111 = vector.shape_cast %110 : vector<1x1x16x64xbf16> to vector<16x64xbf16>
    %112 = vector.shape_cast %109 : vector<16x64xbf16> to vector<1x1x16x64xbf16>
    tpu.vector_store %arg7[%c0_65, %c0_66, %c0_67, %c0_68], %112 {strides = array<i32>} : memref<1x1x16x64xbf16, #tpu.memory_space<vmem>>, vector<1x1x16x64xbf16>,
    return
  }
  func.func @transform_0(%arg0: i32, %arg1: i32, %arg2: i32) -> (i32, i32, i32, i32) {
    %c0_i32 = arith.constant 0 : i32
    %c0_i32_0 = arith.constant 0 : i32
    %c0_i32_1 = arith.constant 0 : i32
    %c0_i32_2 = arith.constant 0 : i32
    return %arg0, %c0_i32, %c0_i32_0, %c0_i32_1 : i32, i32, i32, i32
  }
  func.func @transform_1(%arg0: i32, %arg1: i32, %arg2: i32) -> (i32, i32, i32) {
    %c0_i32 = arith.constant 0 : i32
    %c0_i32_0 = arith.constant 0 : i32
    %c0_i32_1 = arith.constant 0 : i32
    return %c0_i32, %c0_i32_0, %arg1 : i32, i32, i32
  }
  func.func @transform_2(%arg0: i32, %arg1: i32, %arg2: i32) -> (i32, i32) {
    %c0_i32 = arith.constant 0 : i32
    %c0_i32_0 = arith.constant 0 : i32
    return %c0_i32, %arg1 : i32, i32
  }
  func.func @transform_3(%arg0: i32, %arg1: i32, %arg2: i32) -> (i32, i32) {
    %c0_i32 = arith.constant 0 : i32
    %c0_i32_0 = arith.constant 0 : i32
    return %c0_i32, %arg1 : i32, i32
  }
  func.func @transform_4(%arg0: i32, %arg1: i32, %arg2: i32) -> (i32, i32, i32, i32) {
    %c0_i32 = arith.constant 0 : i32
    %c0_i32_0 = arith.constant 0 : i32
    return %arg0, %arg2, %c0_i32, %arg1 : i32, i32, i32, i32
  }
}

</mosaic_0001>

<llo_original>
// kernel: _conv_tap_impl.1
$region0: #{_conv_tap_impl.1}
  #allocation0 [shape = 'u32[]', space=smem, size = 0x4, offset = 0x4, fixed_abs, tag = 'smem constant byte address 0x4 - core index']
  #allocation1 [shape = 'u32[144,128]{1,0:T(1,128)}', space=vmem, size = 0x12000, scoped, tag = 'internal scratch']
  %s0 = inlined_call_operand.vmem [shape: bf16[2,19,19,12], index: 0, kind: input, shape index: {}]
  %s1 = inlined_call_operand.vmem [shape: bf16[16,12,64], index: 1, kind: input, shape index: {}]
  %s2 = inlined_call_operand.vmem [shape: f32[1,64], index: 2, kind: input, shape index: {}]
  %s3 = inlined_call_operand.vmem [shape: f32[1,64], index: 3, kind: input, shape index: {}]
  %s4 = inlined_call_operand.hbm [shape: bf16[2,16,16,64], index: 4, kind: output, shape index: {}]
  %s5 = sld [smem:[#allocation0]]
  $region49: #{_conv_tap_impl.1} parent=0
    _
  %s7 = ssub.s32 1, %s5
  %s8 = scalar_select 0, %s7, %s5
  $region1: #{_conv_tap_impl.1} parent=0
    #allocation2 [shape = 'u8[8192]{0}', space=vmem, size = 0x2000, scoped, tag = 'output window, operand 0']
    #allocation3 [shape = 's32[2]{0}', space=sflag, size = 0x8, scoped, tag = 'scoped memory for _conv_tap_impl.1']
    %9 = vsyncpa [#allocation3], 0
    %s10 = scalar_lea.sflag [#allocation3], 1
    %11 = vsyncpa %s10, 0
    loop: start=0, step=1, limit=34
    $region2: #{_conv_tap_impl.1} parent=1 // loop_pre_header
      _
    $region3: #{_conv_tap_impl.1} parent=1 // loop_header
      %s13 = sphi 0, %s17
      %p14 = scmp.ge.s32.totalorder %s13, 34
      %s20 = sphi 0, %s39
      %s21 = sphi 0, %s35
      %s22 = sphi 0, %s31
      %s23 = sphi 0, %s20
      %s24 = sphi 0, %s21
      %s25 = sphi 0, %s22
      %s26 = sphi 0, %s23
      %s27 = sphi 0, %s24
      %s28 = sphi 0, %s25
      %s42 = sphi 0, %s44
      %s45 = sphi 0, %s42
      %s46 = sphi 0, %s45
      %s62 = sphi 0, %s46
      %s68 = sphi 0, %s70
      %s71 = sphi 0, %s68
      %s72 = sphi 0, %s71
      %s88 = sphi 0, %s72
      %s94 = sphi 0, %s96
      %s97 = sphi 0, %s94
      %s98 = sphi 0, %s97
      %s114 = sphi 0, %s98
      %s120 = sphi 0, %s122
      %s123 = sphi 0, %s120
      %s124 = sphi 0, %s123
      %s140 = sphi 0, %s124
      %s150 = sphi 0, %s152
      %s153 = sphi 0, %s150
      %s154 = sphi 0, %s153
      %s170 = sphi 0, %s154
    $region4: #{_conv_tap_impl.1} parent=1 // loop_header_branch
      %16 = sbr.rel (%p14) target = $region8
    $region5: #{_conv_tap_impl.1} parent=1 // loop_body
      %s18 = ssub.s32 %s13, 1
      %s19 = ssub.s32 %s13, 2
      %s29 = sadd.s32 1, %s22
      %p30 = scmp.ge.s32.totalorder %s29, 16
      %s31 = scalar_select %p30, 0, %s29
      %s32 = sadd.s32 1, %s21
      %s33 = scalar_select %p30, %s32, %s21
      %p34 = scmp.ge.s32.totalorder %s33, 1
      %s35 = scalar_select %p34, 0, %s33
      %s36 = sadd.s32 1, %s20
      %s37 = scalar_select %p34, %s36, %s20
      %p38 = scmp.ge.s32.totalorder %s37, 2
      %s39 = scalar_select %p38, 0, %s37
      %s40 = ssub.s32 %s20, %s39
      %p41 = scmp.eq.s32.totalorder %s40, 0
      %s43 = sadd.s32 %s42, 1
      %s44 = scalar_select %p41, %s42, %s43
      %p47 = pneg %p41
      %p48 = scmp.eq.s32.totalorder %s13, 31
      %p49 = por %p47, %p48
      %p50 = scmp.ne.s32.totalorder %s42, %s45
      %p51 = scmp.eq.s32.totalorder %s13, 0
      %p52 = por %p50, %p51
      %p53 = scmp.ne.s32.totalorder %s42, %s45
      %p54 = scmp.eq.s32.totalorder %s18, 31
      %p55 = por %p53, %p54
      %p56 = scmp.ne.s32.totalorder %s45, %s46
      %p57 = scmp.eq.s32.totalorder %s18, 0
      %p58 = por %p56, %p57
      %p59 = scmp.ne.s32.totalorder %s45, %s46
      %p60 = scmp.eq.s32.totalorder %s19, 31
      %p61 = por %p59, %p60
      %p63 = scmp.ne.s32.totalorder %s46, %s62
      %p64 = scmp.eq.s32.totalorder %s19, 0
      %p65 = por %p63, %p64
      %s66 = ssub.s32 %s21, %s35
      %p67 = scmp.eq.s32.totalorder %s66, 0
      %s69 = sadd.s32 %s68, 1
      %s70 = scalar_select %p67, %s68, %s69
      %p73 = pneg %p67
      %p74 = scmp.eq.s32.totalorder %s13, 31
      %p75 = por %p73, %p74
      %p76 = scmp.ne.s32.totalorder %s68, %s71
      %p77 = scmp.eq.s32.totalorder %s13, 0
      %p78 = por %p76, %p77
      %p79 = scmp.ne.s32.totalorder %s68, %s71
      %p80 = scmp.eq.s32.totalorder %s18, 31
      %p81 = por %p79, %p80
      %p82 = scmp.ne.s32.totalorder %s71, %s72
      %p83 = scmp.eq.s32.totalorder %s18, 0
      %p84 = por %p82, %p83
      %p85 = scmp.ne.s32.totalorder %s71, %s72
      %p86 = scmp.eq.s32.totalorder %s19, 31
      %p87 = por %p85, %p86
      %p89 = scmp.ne.s32.totalorder %s72, %s88
      %p90 = scmp.eq.s32.totalorder %s19, 0
      %p91 = por %p89, %p90
      %s92 = ssub.s32 %s21, %s35
      %p93 = scmp.eq.s32.totalorder %s92, 0
      %s95 = sadd.s32 %s94, 1
      %s96 = scalar_select %p93, %s94, %s95
      %p99 = pneg %p93
      %p100 = scmp.eq.s32.totalorder %s13, 31
      %p101 = por %p99, %p100
      %p102 = scmp.ne.s32.totalorder %s94, %s97
      %p103 = scmp.eq.s32.totalorder %s13, 0
      %p104 = por %p102, %p103
      %p105 = scmp.ne.s32.totalorder %s94, %s97
      %p106 = scmp.eq.s32.totalorder %s18, 31
      %p107 = por %p105, %p106
      %p108 = scmp.ne.s32.totalorder %s97, %s98
      %p109 = scmp.eq.s32.totalorder %s18, 0
      %p110 = por %p108, %p109
      %p111 = scmp.ne.s32.totalorder %s97, %s98
      %p112 = scmp.eq.s32.totalorder %s19, 31
      %p113 = por %p111, %p112
      %p115 = scmp.ne.s32.totalorder %s98, %s114
      %p116 = scmp.eq.s32.totalorder %s19, 0
      %p117 = por %p115, %p116
      %s118 = ssub.s32 %s21, %s35
      %p119 = scmp.eq.s32.totalorder %s118, 0
      %s121 = sadd.s32 %s120, 1
      %s122 = scalar_select %p119, %s120, %s121
      %p125 = pneg %p119
      %p126 = scmp.eq.s32.totalorder %s13, 31
      %p127 = por %p125, %p126
      %p128 = scmp.ne.s32.totalorder %s120, %s123
      %p129 = scmp.eq.s32.totalorder %s13, 0
      %p130 = por %p128, %p129
      %p131 = scmp.ne.s32.totalorder %s120, %s123
      %p132 = scmp.eq.s32.totalorder %s18, 31
      %p133 = por %p131, %p132
      %p134 = scmp.ne.s32.totalorder %s123, %s124
      %p135 = scmp.eq.s32.totalorder %s18, 0
      %p136 = por %p134, %p135
      %p137 = scmp.ne.s32.totalorder %s123, %s124
      %p138 = scmp.eq.s32.totalorder %s19, 31
      %p139 = por %p137, %p138
      %p141 = scmp.ne.s32.totalorder %s124, %s140
      %p142 = scmp.eq.s32.totalorder %s19, 0
      %p143 = por %p141, %p142
      %s144 = ssub.s32 %s20, %s39
      %s145 = ssub.s32 %s22, %s31
      %s146 = sor.u32 %s144, %s145
      %s147 = ssub.s32 %s21, %s35
      %s148 = sor.u32 %s146, %s147
      %p149 = scmp.eq.s32.totalorder %s148, 0
      %s151 = sadd.s32 %s150, 1
      %s152 = scalar_select %p149, %s150, %s151
      %p155 = pneg %p149
      %p156 = scmp.eq.s32.totalorder %s13, 31
      %p157 = por %p155, %p156
      %p158 = scmp.ne.s32.totalorder %s150, %s153
      %p159 = scmp.eq.s32.totalorder %s13, 0
      %p160 = por %p158, %p159
      %p161 = scmp.ne.s32.totalorder %s150, %s153
      %p162 = scmp.eq.s32.totalorder %s18, 31
      %p163 = por %p161, %p162
      %p164 = scmp.ne.s32.totalorder %s153, %s154
      %p165 = scmp.eq.s32.totalorder %s18, 0
      %p166 = por %p164, %p165
      %p167 = scmp.ne.s32.totalorder %s153, %s154
      %p168 = scmp.eq.s32.totalorder %s19, 31
      %p169 = por %p167, %p168
      %p171 = scmp.ne.s32.totalorder %s154, %s170
      %p172 = scmp.eq.s32.totalorder %s19, 0
      %p173 = por %p171, %p172
      %p174 = scmp.le.s32.totalorder 1, %s13
      %p175 = scmp.lt.s32.totalorder %s13, 33
      %p176 = pnand %p174, %p175
      %p177 = pneg %p176
      // Predicated region
      $region9: #{_conv_tap_impl.1} parent=5 // pred_check
        _
      $region10: #{_conv_tap_impl.1} parent=5 // pred_check_branch
        %179 = sbr.rel (%p176) target = $region12
      $region11: #{_conv_tap_impl.1} parent=5 // pred_region
        %s180 = ssub.s32 %s13, 1
        // Predicated region
        $region13: #{_conv_tap_impl.1} parent=11 // pred_check
          %p181 = pneg %p84
        $region14: #{_conv_tap_impl.1} parent=11 // pred_check_branch
          %183 = sbr.rel (%p181) target = $region16
        $region15: #{_conv_tap_impl.1} parent=11 // pred_region
          %p184 = scmp.lt.s32.totalorder %s24, 0
          %s185 = scalar_select %p184, %s24, 0
          %s186 = smul.addr %s185, 4
          %s187 = scalar_lea.vmem %s1, %s186
        $region16: #{_conv_tap_impl.1} parent=11 // pred_fallthru
          _
        // Predicated region
        $region17: #{_conv_tap_impl.1} parent=11 // pred_check
          %p188 = pneg %p110
        $region18: #{_conv_tap_impl.1} parent=11 // pred_check_branch
          %190 = sbr.rel (%p188) target = $region20
        $region19: #{_conv_tap_impl.1} parent=11 // pred_region
          %p191 = scmp.lt.s32.totalorder %s24, 0
          %s192 = scalar_select %p191, %s24, 0
          %s193 = scalar_lea.vmem %s2, %s192
        $region20: #{_conv_tap_impl.1} parent=11 // pred_fallthru
          _
        // Predicated region
        $region21: #{_conv_tap_impl.1} parent=11 // pred_check
          %p194 = pneg %p136
        $region22: #{_conv_tap_impl.1} parent=11 // pred_check_branch
          %196 = sbr.rel (%p194) target = $region24
        $region23: #{_conv_tap_impl.1} parent=11 // pred_region
          %p197 = scmp.lt.s32.totalorder %s24, 0
          %s198 = scalar_select %p197, %s24, 0
          %s199 = scalar_lea.vmem %s3, %s198
        $region24: #{_conv_tap_impl.1} parent=11 // pred_fallthru
          _
      $region12: #{_conv_tap_impl.1} parent=5 // pred_fallthru
        _
      %p200 = scmp.lt.s32.totalorder %s13, 32
      // Predicated region
      $region25: #{_conv_tap_impl.1} parent=5 // pred_check
        %p201 = pneg %p200
      $region26: #{_conv_tap_impl.1} parent=5 // pred_check_branch
        %203 = sbr.rel (%p201) target = $region28
      $region27: #{_conv_tap_impl.1} parent=5 // pred_region
        // Predicated region
        $region29: #{_conv_tap_impl.1} parent=27 // pred_check
          %p204 = pneg %p52
        $region30: #{_conv_tap_impl.1} parent=27 // pred_check_branch
          %206 = sbr.rel (%p204) target = $region32
        $region31: #{_conv_tap_impl.1} parent=27 // pred_region
          %p207 = scmp.lt.s32.totalorder %s20, 1
          %s208 = scalar_select %p207, %s20, 1
          %s209 = smul.addr %s208, 57
          %s210 = smul.addr %s209, 4
          %s211 = scalar_lea.vmem %s0, %s210
        $region32: #{_conv_tap_impl.1} parent=27 // pred_fallthru
          _
      $region28: #{_conv_tap_impl.1} parent=5 // pred_fallthru
        _
      %p212 = scmp.le.s32.totalorder 1, %s13
      %p213 = scmp.lt.s32.totalorder %s13, 33
      %p214 = pnand %p212, %p213
      %p215 = pneg %p214
      // Predicated region
      $region33: #{_conv_tap_impl.1} parent=5 // pred_check
        _
      $region34: #{_conv_tap_impl.1} parent=5 // pred_check_branch
        %217 = sbr.rel (%p214) target = $region36
      $region35: #{_conv_tap_impl.1} parent=5 // pred_region
        %s218 = ssub.s32 %s13, 1
        %p219 = scmp.lt.s32.totalorder %s23, 1
        %s220 = scalar_select %p219, %s23, 1
        %s221 = smul.addr %s220, 57
        %s222 = smul.addr %s221, 4
        %s223 = scalar_lea.vmem %s0, %s222
        %p224 = pneg %p58
        %p225 = pneg %p55
        %p226 = scmp.lt.s32.totalorder %s24, 0
        %s227 = scalar_select %p226, %s24, 0
        %s228 = smul.addr %s227, 4
        %s229 = scalar_lea.vmem %s1, %s228
        %p230 = pneg %p84
        %p231 = pneg %p81
        %p232 = scmp.lt.s32.totalorder %s24, 0
        %s233 = scalar_select %p232, %s24, 0
        %s234 = scalar_lea.vmem %s2, %s233
        %p235 = pneg %p110
        %p236 = pneg %p107
        %p237 = scmp.lt.s32.totalorder %s24, 0
        %s238 = scalar_select %p237, %s24, 0
        %s239 = scalar_lea.vmem %s3, %s238
        %p240 = pneg %p136
        %p241 = pneg %p133
        %p242 = pneg %p166
        %p243 = pneg %p163
        %s244 = sand.u32 %s153, 1
        %s245 = scalar_lea.sflag [#allocation3], %s244
        %s246 = sand.u32 %s153, 1
        %s247 = smul.addr %s246, 8
        %s248 = scalar_lea.vmem [#allocation2], %s247
        %p249 = scmp.lt.s32.totalorder %s23, 1
        %s250 = scalar_select %p249, %s23, 1
        %s251 = smul.addr %s250, 57
        %s252 = smul.addr %s251, 4
        %s253 = scalar_lea.vmem %s0, %s252
        %p254 = scmp.lt.s32.totalorder %s24, 0
        %s255 = scalar_select %p254, %s24, 0
        %s256 = smul.addr %s255, 4
        %s257 = scalar_lea.vmem %s1, %s256
        %p258 = scmp.lt.s32.totalorder %s24, 0
        %s259 = scalar_select %p258, %s24, 0
        %s260 = scalar_lea.vmem %s2, %s259
        %p261 = scmp.lt.s32.totalorder %s24, 0
        %s262 = scalar_select %p261, %s24, 0
        %s263 = scalar_lea.vmem %s3, %s262
        %s265 = smul.u32 %s25, 3
        %s266 = smul.addr %s265, 4
        %s267 = scalar_lea.vmem %s253, %s266
        %v268 = vld [vmem:[%s267] sm:$0xf]
        %v269 = vld [vmem:[%s267 + $0x4] sm:$0xf]
        %v270 = vld [vmem:[%s267 + $0x8] sm:$0x3]
        %v271 = vld [vmem:[%s257] sm:$0xf]
        %v272 = vld [vmem:[%s257 + $0x4] sm:$0x3]
        %s273 = scalar_lea.vmem %s257, 8
        %v274 = vld [vmem:[%s273] sm:$0xf]
        %v275 = vld [vmem:[%s273 + $0x4] sm:$0x3]
        %v279 = vunpack.c.l.b16 %v268
        %v280 = vunpack.c.l.b16 %v269
        %v281 = vunpack.c.l.b16 %v270
        %v282 = vpack.c.b16 %v280, %v279
        %v283 = vpack.c.b16 %v281, %v281
        %vm284 = vsmask.f32 7424
        %v286 = vshrl.u32 %v282, 16
        %v288 = vshll.u32 %v282, 16
        %v290 = vrot.slane %v288, 1
        %v291 = vor.u32 %v286, %v290
        %v293 = vshll.u32 %v283, 16
        %v295 = vrot.slane %v293, 1
        %v296 = vsel %vm284, %v291, %v295
        %v299 = vunpack.c.l.b16 %v274
        %v300 = vunpack.c.l.b16 %v275
        %v301 = vpack.c.b16 %v300, %v299
        %vm302 = vcmask 97280
        %v304 = vsel %vm302, %v296, 0
        %vm306 = vcmask 1045504
        %v308 = vsel %vm306, %v301, 0
        %310 = vmatprep.subr.bf16.mxu0 0
        %311 = vmatpush1.bf16.msra.mxu0 %v308
        %312 = vmatprep.subr.bf16.mxu0 0
        %313 = vmatpush1.bf16.msra.mxu0 0
        %314 = vmatprep.subr.bf16.mxu0 0
        %315 = vmatpush1.bf16.msra.mxu0 0
        %316 = vmatprep.subr.bf16.mxu0 0
        %317 = vmatpush1.bf16.msra.mxu0 0
        %318 = vmatprep.subr.bf16.mxu0 0
        %319 = vmatpush1.bf16.msra.mxu0 0
        %320 = vmatprep.subr.bf16.mxu0 0
        %321 = vmatpush1.bf16.msra.mxu0 0
        %322 = vmatprep.subr.bf16.mxu0 0
        %323 = vmatpush1.bf16.msra.mxu0 0
        %324 = vmatprep.subr.bf16.mxu0 0
        %325 = vmatpush1.bf16.msra.mxu0 0
        %326 = vmatprep.subr.bf16.mxu0 0
        %327 = vmatpush1.bf16.msra.mxu0 0
        %328 = vmatprep.subr.bf16.mxu0 0
        %329 = vmatpush1.bf16.msra.mxu0 0
        %330 = vmatprep.subr.bf16.mxu0 0
        %331 = vmatpush1.bf16.msra.mxu0 0
        %332 = vmatprep.subr.bf16.mxu0 0
        %333 = vmatpush1.bf16.msra.mxu0 0
        %334 = vmatprep.subr.bf16.mxu0 0
        %335 = vmatpush1.bf16.msra.mxu0 0
        %336 = vmatprep.subr.bf16.mxu0 0
        %337 = vmatpush1.bf16.msra.mxu0 0
        %338 = vmatprep.subr.bf16.mxu0 0
        %339 = vmatpush1.bf16.msra.mxu0 0
        %340 = vmatprep.subr.bf16.mxu0 0
        %341 = vmatpush1.bf16.msra.mxu0 0
        %342 = vmatprep.mubr.bf16.mxu0 0
        %343 = vmatmul.mubr.bf16.gmra.mrb[0].mxu0 %v304
        %v344 = vpop.f32.mrb[0].mxu0
        %v345 = vadd.f32 0.0, %v344
        %v346 = vpop.f32.mrb[0].mxu0
        %v347 = vpop.f32.mrb[0].mxu0
        %v348 = vadd.f32 0.0, %v347
        %v349 = vpop.f32.mrb[0].mxu0
        %350 = vdwg.mxu0
        %v353 = vunpack.c.l.b16 %v271
        %v354 = vunpack.c.l.b16 %v272
        %v355 = vpack.c.b16 %v354, %v353
        %v356 = vsel %vm302, %v282, 0
        %v359 = vsel %vm306, %v355, 0
        %361 = vmatprep.subr.bf16.mxu0 0
        %362 = vmatpush1.bf16.msra.mxu0 %v359
        %363 = vmatprep.subr.bf16.mxu0 0
        %364 = vmatpush1.bf16.msra.mxu0 0
        %365 = vmatprep.subr.bf16.mxu0 0
        %366 = vmatpush1.bf16.msra.mxu0 0
        %367 = vmatprep.subr.bf16.mxu0 0
        %368 = vmatpush1.bf16.msra.mxu0 0
        %369 = vmatprep.subr.bf16.mxu0 0
        %370 = vmatpush1.bf16.msra.mxu0 0
        %371 = vmatprep.subr.bf16.mxu0 0
        %372 = vmatpush1.bf16.msra.mxu0 0
        %373 = vmatprep.subr.bf16.mxu0 0
        %374 = vmatpush1.bf16.msra.mxu0 0
        %375 = vmatprep.subr.bf16.mxu0 0
        %376 = vmatpush1.bf16.msra.mxu0 0
        %377 = vmatprep.subr.bf16.mxu0 0
        %378 = vmatpush1.bf16.msra.mxu0 0
        %379 = vmatprep.subr.bf16.mxu0 0
        %380 = vmatpush1.bf16.msra.mxu0 0
        %381 = vmatprep.subr.bf16.mxu0 0
        %382 = vmatpush1.bf16.msra.mxu0 0
        %383 = vmatprep.subr.bf16.mxu0 0
        %384 = vmatpush1.bf16.msra.mxu0 0
        %385 = vmatprep.subr.bf16.mxu0 0
        %386 = vmatpush1.bf16.msra.mxu0 0
        %387 = vmatprep.subr.bf16.mxu0 0
        %388 = vmatpush1.bf16.msra.mxu0 0
        %389 = vmatprep.subr.bf16.mxu0 0
        %390 = vmatpush1.bf16.msra.mxu0 0
        %391 = vmatprep.subr.bf16.mxu0 0
        %392 = vmatpush1.bf16.msra.mxu0 0
        %393 = vmatprep.mubr.bf16.mxu0 0
        %394 = vmatmul.mubr.bf16.gmra.mrb[0].mxu0 %v356
        %v395 = vpop.f32.mrb[0].mxu0
        %v396 = vadd.f32 %v345, %v395
        %v397 = vpop.f32.mrb[0].mxu0
        %v398 = vpop.f32.mrb[0].mxu0
        %v399 = vadd.f32 %v348, %v398
        %v400 = vpop.f32.mrb[0].mxu0
        %401 = vdwg.mxu0
        %s402 = scalar_lea.vmem %s257, 16
        %v403 = vld [vmem:[%s402] sm:$0xf]
        %v404 = vld [vmem:[%s402 + $0x4] sm:$0x3]
        %vm405 = vcmask 1046528
        %v406 = vrot.slane %v282, 1
        %v407 = vrot.slane %v283, 1
        %v408 = vsel %vm405, %v406, %v407
        %v411 = vunpack.c.l.b16 %v403
        %v412 = vunpack.c.l.b16 %v404
        %v413 = vpack.c.b16 %v412, %v411
        %v415 = vsel %vm302, %v408, 0
        %v418 = vsel %vm306, %v413, 0
        %420 = vmatprep.subr.bf16.mxu0 0
        %421 = vmatpush1.bf16.msra.mxu0 %v418
        %422 = vmatprep.subr.bf16.mxu0 0
        %423 = vmatpush1.bf16.msra.mxu0 0
        %424 = vmatprep.subr.bf16.mxu0 0
        %425 = vmatpush1.bf16.msra.mxu0 0
        %426 = vmatprep.subr.bf16.mxu0 0
        %427 = vmatpush1.bf16.msra.mxu0 0
        %428 = vmatprep.subr.bf16.mxu0 0
        %429 = vmatpush1.bf16.msra.mxu0 0
        %430 = vmatprep.subr.bf16.mxu0 0
        %431 = vmatpush1.bf16.msra.mxu0 0
        %432 = vmatprep.subr.bf16.mxu0 0
        %433 = vmatpush1.bf16.msra.mxu0 0
        %434 = vmatprep.subr.bf16.mxu0 0
        %435 = vmatpush1.bf16.msra.mxu0 0
        %436 = vmatprep.subr.bf16.mxu0 0
        %437 = vmatpush1.bf16.msra.mxu0 0
        %438 = vmatprep.subr.bf16.mxu0 0
        %439 = vmatpush1.bf16.msra.mxu0 0
        %440 = vmatprep.subr.bf16.mxu0 0
        %441 = vmatpush1.bf16.msra.mxu0 0
        %442 = vmatprep.subr.bf16.mxu0 0
        %443 = vmatpush1.bf16.msra.mxu0 0
        %444 = vmatprep.subr.bf16.mxu0 0
        %445 = vmatpush1.bf16.msra.mxu0 0
        %446 = vmatprep.subr.bf16.mxu0 0
        %447 = vmatpush1.bf16.msra.mxu0 0
        %448 = vmatprep.subr.bf16.mxu0 0
        %449 = vmatpush1.bf16.msra.mxu0 0
        %450 = vmatprep.subr.bf16.mxu0 0
        %451 = vmatpush1.bf16.msra.mxu0 0
        %452 = vmatprep.mubr.bf16.mxu0 0
        %453 = vmatmul.mubr.bf16.gmra.mrb[0].mxu0 %v415
        %v454 = vpop.f32.mrb[0].mxu0
        %v455 = vadd.f32 0.0, %v454
        %v456 = vpop.f32.mrb[0].mxu0
        %v457 = vpop.f32.mrb[0].mxu0
        %v458 = vadd.f32 0.0, %v457
        %v459 = vpop.f32.mrb[0].mxu0
        %460 = vdwg.mxu0
        %v461 = vadd.f32 %v396, %v455
        %v462 = vadd.f32 %v399, %v458
        %s463 = scalar_lea.vmem %s257, 24
        %v464 = vld [vmem:[%s463] sm:$0xf]
        %v465 = vld [vmem:[%s463 + $0x4] sm:$0x3]
        %vm466 = vsmask.f32 6400
        %v467 = vrot.slane %v286, 1
        %v468 = vrot.slane %v288, 2
        %v469 = vor.u32 %v467, %v468
        %v470 = vshrl.u32 %v283, 16
        %v472 = vrot.slane %v470, 1
        %v473 = vrot.slane %v293, 2
        %v474 = vor.u32 %v472, %v473
        %v475 = vsel %vm466, %v469, %v474
        %v478 = vunpack.c.l.b16 %v464
        %v479 = vunpack.c.l.b16 %v465
        %v480 = vpack.c.b16 %v479, %v478
        %v482 = vsel %vm302, %v475, 0
        %v485 = vsel %vm306, %v480, 0
        %487 = vmatprep.subr.bf16.mxu0 0
        %488 = vmatpush1.bf16.msra.mxu0 %v485
        %489 = vmatprep.subr.bf16.mxu0 0
        %490 = vmatpush1.bf16.msra.mxu0 0
        %491 = vmatprep.subr.bf16.mxu0 0
        %492 = vmatpush1.bf16.msra.mxu0 0
        %493 = vmatprep.subr.bf16.mxu0 0
        %494 = vmatpush1.bf16.msra.mxu0 0
        %495 = vmatprep.subr.bf16.mxu0 0
        %496 = vmatpush1.bf16.msra.mxu0 0
        %497 = vmatprep.subr.bf16.mxu0 0
        %498 = vmatpush1.bf16.msra.mxu0 0
        %499 = vmatprep.subr.bf16.mxu0 0
        %500 = vmatpush1.bf16.msra.mxu0 0
        %501 = vmatprep.subr.bf16.mxu0 0
        %502 = vmatpush1.bf16.msra.mxu0 0
        %503 = vmatprep.subr.bf16.mxu0 0
        %504 = vmatpush1.bf16.msra.mxu0 0
        %505 = vmatprep.subr.bf16.mxu0 0
        %506 = vmatpush1.bf16.msra.mxu0 0
        %507 = vmatprep.subr.bf16.mxu0 0
        %508 = vmatpush1.bf16.msra.mxu0 0
        %509 = vmatprep.subr.bf16.mxu0 0
        %510 = vmatpush1.bf16.msra.mxu0 0
        %511 = vmatprep.subr.bf16.mxu0 0
        %512 = vmatpush1.bf16.msra.mxu0 0
        %513 = vmatprep.subr.bf16.mxu0 0
        %514 = vmatpush1.bf16.msra.mxu0 0
        %515 = vmatprep.subr.bf16.mxu0 0
        %516 = vmatpush1.bf16.msra.mxu0 0
        %517 = vmatprep.subr.bf16.mxu0 0
        %518 = vmatpush1.bf16.msra.mxu0 0
        %519 = vmatprep.mubr.bf16.mxu0 0
        %520 = vmatmul.mubr.bf16.gmra.mrb[0].mxu0 %v482
        %v521 = vpop.f32.mrb[0].mxu0
        %v522 = vadd.f32 0.0, %v521
        %v523 = vpop.f32.mrb[0].mxu0
        %v524 = vpop.f32.mrb[0].mxu0
        %v525 = vadd.f32 0.0, %v524
        %v526 = vpop.f32.mrb[0].mxu0
        %527 = vdwg.mxu0
        %v528 = vadd.f32 %v461, %v522
        %v529 = vadd.f32 %v462, %v525
        %s530 = sadd.s32 %s25, 1
        %s531 = smul.u32 %s530, 3
        %s532 = smul.addr %s531, 4
        %s533 = scalar_lea.vmem %s253, %s532
        %v534 = vld [vmem:[%s533] sm:$0xf]
        %v535 = vld [vmem:[%s533 + $0x4] sm:$0xf]
        %v536 = vld [vmem:[%s533 + $0x8] sm:$0x3]
        %s537 = scalar_lea.vmem %s257, 32
        %v538 = vld [vmem:[%s537] sm:$0xf]
        %v539 = vld [vmem:[%s537 + $0x4] sm:$0x3]
        %v542 = vunpack.c.l.b16 %v534
        %v543 = vunpack.c.l.b16 %v535
        %v544 = vpack.c.b16 %v543, %v542
        %v547 = vunpack.c.l.b16 %v538
        %v548 = vunpack.c.l.b16 %v539
        %v549 = vpack.c.b16 %v548, %v547
        %v551 = vsel %vm302, %v544, 0
        %v554 = vsel %vm306, %v549, 0
        %556 = vmatprep.subr.bf16.mxu0 0
        %557 = vmatpush1.bf16.msra.mxu0 %v554
        %558 = vmatprep.subr.bf16.mxu0 0
        %559 = vmatpush1.bf16.msra.mxu0 0
        %560 = vmatprep.subr.bf16.mxu0 0
        %561 = vmatpush1.bf16.msra.mxu0 0
        %562 = vmatprep.subr.bf16.mxu0 0
        %563 = vmatpush1.bf16.msra.mxu0 0
        %564 = vmatprep.subr.bf16.mxu0 0
        %565 = vmatpush1.bf16.msra.mxu0 0
        %566 = vmatprep.subr.bf16.mxu0 0
        %567 = vmatpush1.bf16.msra.mxu0 0
        %568 = vmatprep.subr.bf16.mxu0 0
        %569 = vmatpush1.bf16.msra.mxu0 0
        %570 = vmatprep.subr.bf16.mxu0 0
        %571 = vmatpush1.bf16.msra.mxu0 0
        %572 = vmatprep.subr.bf16.mxu0 0
        %573 = vmatpush1.bf16.msra.mxu0 0
        %574 = vmatprep.subr.bf16.mxu0 0
        %575 = vmatpush1.bf16.msra.mxu0 0
        %576 = vmatprep.subr.bf16.mxu0 0
        %577 = vmatpush1.bf16.msra.mxu0 0
        %578 = vmatprep.subr.bf16.mxu0 0
        %579 = vmatpush1.bf16.msra.mxu0 0
        %580 = vmatprep.subr.bf16.mxu0 0
        %581 = vmatpush1.bf16.msra.mxu0 0
        %582 = vmatprep.subr.bf16.mxu0 0
        %583 = vmatpush1.bf16.msra.mxu0 0
        %584 = vmatprep.subr.bf16.mxu0 0
        %585 = vmatpush1.bf16.msra.mxu0 0
        %586 = vmatprep.subr.bf16.mxu0 0
        %587 = vmatpush1.bf16.msra.mxu0 0
        %588 = vmatprep.mubr.bf16.mxu0 0
        %589 = vmatmul.mubr.bf16.gmra.mrb[0].mxu0 %v551
        %v590 = vpop.f32.mrb[0].mxu0
        %v591 = vadd.f32 0.0, %v590
        %v592 = vpop.f32.mrb[0].mxu0
        %v593 = vpop.f32.mrb[0].mxu0
        %v594 = vadd.f32 0.0, %v593
        %v595 = vpop.f32.mrb[0].mxu0
        %596 = vdwg.mxu0
        %v597 = vadd.f32 %v528, %v591
        %v598 = vadd.f32 %v529, %v594
        %s599 = scalar_lea.vmem %s257, 40
        %v600 = vld [vmem:[%s599] sm:$0xf]
        %v601 = vld [vmem:[%s599 + $0x4] sm:$0x3]
        %v603 = vunpack.c.l.b16 %v536
        %v604 = vpack.c.b16 %v603, %v603
        %v605 = vshrl.u32 %v544, 16
        %v607 = vshll.u32 %v544, 16
        %v609 = vrot.slane %v607, 1
        %v610 = vor.u32 %v605, %v609
        %v612 = vshll.u32 %v604, 16
        %v614 = vrot.slane %v612, 1
        %v615 = vsel %vm284, %v610, %v614
        %v618 = vunpack.c.l.b16 %v600
        %v619 = vunpack.c.l.b16 %v601
        %v620 = vpack.c.b16 %v619, %v618
        %v622 = vsel %vm302, %v615, 0
        %v625 = vsel %vm306, %v620, 0
        %627 = vmatprep.subr.bf16.mxu0 0
        %628 = vmatpush1.bf16.msra.mxu0 %v625
        %629 = vmatprep.subr.bf16.mxu0 0
        %630 = vmatpush1.bf16.msra.mxu0 0
        %631 = vmatprep.subr.bf16.mxu0 0
        %632 = vmatpush1.bf16.msra.mxu0 0
        %633 = vmatprep.subr.bf16.mxu0 0
        %634 = vmatpush1.bf16.msra.mxu0 0
        %635 = vmatprep.subr.bf16.mxu0 0
        %636 = vmatpush1.bf16.msra.mxu0 0
        %637 = vmatprep.subr.bf16.mxu0 0
        %638 = vmatpush1.bf16.msra.mxu0 0
        %639 = vmatprep.subr.bf16.mxu0 0
        %640 = vmatpush1.bf16.msra.mxu0 0
        %641 = vmatprep.subr.bf16.mxu0 0
        %642 = vmatpush1.bf16.msra.mxu0 0
        %643 = vmatprep.subr.bf16.mxu0 0
        %644 = vmatpush1.bf16.msra.mxu0 0
        %645 = vmatprep.subr.bf16.mxu0 0
        %646 = vmatpush1.bf16.msra.mxu0 0
        %647 = vmatprep.subr.bf16.mxu0 0
        %648 = vmatpush1.bf16.msra.mxu0 0
        %649 = vmatprep.subr.bf16.mxu0 0
        %650 = vmatpush1.bf16.msra.mxu0 0
        %651 = vmatprep.subr.bf16.mxu0 0
        %652 = vmatpush1.bf16.msra.mxu0 0
        %653 = vmatprep.subr.bf16.mxu0 0
        %654 = vmatpush1.bf16.msra.mxu0 0
        %655 = vmatprep.subr.bf16.mxu0 0
        %656 = vmatpush1.bf16.msra.mxu0 0
        %657 = vmatprep.subr.bf16.mxu0 0
        %658 = vmatpush1.bf16.msra.mxu0 0
        %659 = vmatprep.mubr.bf16.mxu0 0
        %660 = vmatmul.mubr.bf16.gmra.mrb[0].mxu0 %v622
        %v661 = vpop.f32.mrb[0].mxu0
        %v662 = vadd.f32 0.0, %v661
        %v663 = vpop.f32.mrb[0].mxu0
        %v664 = vpop.f32.mrb[0].mxu0
        %v665 = vadd.f32 0.0, %v664
        %v666 = vpop.f32.mrb[0].mxu0
        %667 = vdwg.mxu0
        %v668 = vadd.f32 %v597, %v662
        %v669 = vadd.f32 %v598, %v665
        %s670 = scalar_lea.vmem %s257, 48
        %v671 = vld [vmem:[%s670] sm:$0xf]
        %v672 = vld [vmem:[%s670 + $0x4] sm:$0x3]
        %v673 = vrot.slane %v544, 1
        %v674 = vrot.slane %v604, 1
        %v675 = vsel %vm405, %v673, %v674
        %v678 = vunpack.c.l.b16 %v671
        %v679 = vunpack.c.l.b16 %v672
        %v680 = vpack.c.b16 %v679, %v678
        %v682 = vsel %vm302, %v675, 0
        %v685 = vsel %vm306, %v680, 0
        %687 = vmatprep.subr.bf16.mxu0 0
        %688 = vmatpush1.bf16.msra.mxu0 %v685
        %689 = vmatprep.subr.bf16.mxu0 0
        %690 = vmatpush1.bf16.msra.mxu0 0
        %691 = vmatprep.subr.bf16.mxu0 0
        %692 = vmatpush1.bf16.msra.mxu0 0
        %693 = vmatprep.subr.bf16.mxu0 0
        %694 = vmatpush1.bf16.msra.mxu0 0
        %695 = vmatprep.subr.bf16.mxu0 0
        %696 = vmatpush1.bf16.msra.mxu0 0
        %697 = vmatprep.subr.bf16.mxu0 0
        %698 = vmatpush1.bf16.msra.mxu0 0
        %699 = vmatprep.subr.bf16.mxu0 0
        %700 = vmatpush1.bf16.msra.mxu0 0
        %701 = vmatprep.subr.bf16.mxu0 0
        %702 = vmatpush1.bf16.msra.mxu0 0
        %703 = vmatprep.subr.bf16.mxu0 0
        %704 = vmatpush1.bf16.msra.mxu0 0
        %705 = vmatprep.subr.bf16.mxu0 0
        %706 = vmatpush1.bf16.msra.mxu0 0
        %707 = vmatprep.subr.bf16.mxu0 0
        %708 = vmatpush1.bf16.msra.mxu0 0
        %709 = vmatprep.subr.bf16.mxu0 0
        %710 = vmatpush1.bf16.msra.mxu0 0
        %711 = vmatprep.subr.bf16.mxu0 0
        %712 = vmatpush1.bf16.msra.mxu0 0
        %713 = vmatprep.subr.bf16.mxu0 0
        %714 = vmatpush1.bf16.msra.mxu0 0
        %715 = vmatprep.subr.bf16.mxu0 0
        %716 = vmatpush1.bf16.msra.mxu0 0
        %717 = vmatprep.subr.bf16.mxu0 0
        %718 = vmatpush1.bf16.msra.mxu0 0
        %719 = vmatprep.mubr.bf16.mxu0 0
        %720 = vmatmul.mubr.bf16.gmra.mrb[0].mxu0 %v682
        %v721 = vpop.f32.mrb[0].mxu0
        %v722 = vadd.f32 0.0, %v721
        %v723 = vpop.f32.mrb[0].mxu0
        %v724 = vpop.f32.mrb[0].mxu0
        %v725 = vadd.f32 0.0, %v724
        %v726 = vpop.f32.mrb[0].mxu0
        %727 = vdwg.mxu0
        %v728 = vadd.f32 %v668, %v722
        %v729 = vadd.f32 %v669, %v725
        %s730 = scalar_lea.vmem %s257, 56
        %v731 = vld [vmem:[%s730] sm:$0xf]
        %v732 = vld [vmem:[%s730 + $0x4] sm:$0x3]
        %v733 = vrot.slane %v605, 1
        %v734 = vrot.slane %v607, 2
        %v735 = vor.u32 %v733, %v734
        %v736 = vshrl.u32 %v604, 16
        %v738 = vrot.slane %v736, 1
        %v739 = vrot.slane %v612, 2
        %v740 = vor.u32 %v738, %v739
        %v741 = vsel %vm466, %v735, %v740
        %v744 = vunpack.c.l.b16 %v731
        %v745 = vunpack.c.l.b16 %v732
        %v746 = vpack.c.b16 %v745, %v744
        %v748 = vsel %vm302, %v741, 0
        %v751 = vsel %vm306, %v746, 0
        %753 = vmatprep.subr.bf16.mxu0 0
        %754 = vmatpush1.bf16.msra.mxu0 %v751
        %755 = vmatprep.subr.bf16.mxu0 0
        %756 = vmatpush1.bf16.msra.mxu0 0
        %757 = vmatprep.subr.bf16.mxu0 0
        %758 = vmatpush1.bf16.msra.mxu0 0
        %759 = vmatprep.subr.bf16.mxu0 0
        %760 = vmatpush1.bf16.msra.mxu0 0
        %761 = vmatprep.subr.bf16.mxu0 0
        %762 = vmatpush1.bf16.msra.mxu0 0
        %763 = vmatprep.subr.bf16.mxu0 0
        %764 = vmatpush1.bf16.msra.mxu0 0
        %765 = vmatprep.subr.bf16.mxu0 0
        %766 = vmatpush1.bf16.msra.mxu0 0
        %767 = vmatprep.subr.bf16.mxu0 0
        %768 = vmatpush1.bf16.msra.mxu0 0
        %769 = vmatprep.subr.bf16.mxu0 0
        %770 = vmatpush1.bf16.msra.mxu0 0
        %771 = vmatprep.subr.bf16.mxu0 0
        %772 = vmatpush1.bf16.msra.mxu0 0
        %773 = vmatprep.subr.bf16.mxu0 0
        %774 = vmatpush1.bf16.msra.mxu0 0
        %775 = vmatprep.subr.bf16.mxu0 0
        %776 = vmatpush1.bf16.msra.mxu0 0
        %777 = vmatprep.subr.bf16.mxu0 0
        %778 = vmatpush1.bf16.msra.mxu0 0
        %779 = vmatprep.subr.bf16.mxu0 0
        %780 = vmatpush1.bf16.msra.mxu0 0
        %781 = vmatprep.subr.bf16.mxu0 0
        %782 = vmatpush1.bf16.msra.mxu0 0
        %783 = vmatprep.subr.bf16.mxu0 0
        %784 = vmatpush1.bf16.msra.mxu0 0
        %785 = vmatprep.mubr.bf16.mxu0 0
        %786 = vmatmul.mubr.bf16.gmra.mrb[0].mxu0 %v748
        %v787 = vpop.f32.mrb[0].mxu0
        %v788 = vadd.f32 0.0, %v787
        %v789 = vpop.f32.mrb[0].mxu0
        %v790 = vpop.f32.mrb[0].mxu0
        %v791 = vadd.f32 0.0, %v790
        %v792 = vpop.f32.mrb[0].mxu0
        %793 = vdwg.mxu0
        %v794 = vadd.f32 %v728, %v788
        %v795 = vadd.f32 %v729, %v791
        %s796 = sadd.s32 %s25, 2
        %s797 = smul.u32 %s796, 3
        %s798 = smul.addr %s797, 4
        %s799 = scalar_lea.vmem %s253, %s798
        %v800 = vld [vmem:[%s799] sm:$0xf]
        %v801 = vld [vmem:[%s799 + $0x4] sm:$0xf]
        %v802 = vld [vmem:[%s799 + $0x8] sm:$0x3]
        %s803 = scalar_lea.vmem %s257, 64
        %v804 = vld [vmem:[%s803] sm:$0xf]
        %v805 = vld [vmem:[%s803 + $0x4] sm:$0x3]
        %v808 = vunpack.c.l.b16 %v800
        %v809 = vunpack.c.l.b16 %v801
        %v810 = vpack.c.b16 %v809, %v808
        %v813 = vunpack.c.l.b16 %v804
        %v814 = vunpack.c.l.b16 %v805
        %v815 = vpack.c.b16 %v814, %v813
        %v817 = vsel %vm302, %v810, 0
        %v820 = vsel %vm306, %v815, 0
        %822 = vmatprep.subr.bf16.mxu0 0
        %823 = vmatpush1.bf16.msra.mxu0 %v820
        %824 = vmatprep.subr.bf16.mxu0 0
        %825 = vmatpush1.bf16.msra.mxu0 0
        %826 = vmatprep.subr.bf16.mxu0 0
        %827 = vmatpush1.bf16.msra.mxu0 0
        %828 = vmatprep.subr.bf16.mxu0 0
        %829 = vmatpush1.bf16.msra.mxu0 0
        %830 = vmatprep.subr.bf16.mxu0 0
        %831 = vmatpush1.bf16.msra.mxu0 0
        %832 = vmatprep.subr.bf16.mxu0 0
        %833 = vmatpush1.bf16.msra.mxu0 0
        %834 = vmatprep.subr.bf16.mxu0 0
        %835 = vmatpush1.bf16.msra.mxu0 0
        %836 = vmatprep.subr.bf16.mxu0 0
        %837 = vmatpush1.bf16.msra.mxu0 0
        %838 = vmatprep.subr.bf16.mxu0 0
        %839 = vmatpush1.bf16.msra.mxu0 0
        %840 = vmatprep.subr.bf16.mxu0 0
        %841 = vmatpush1.bf16.msra.mxu0 0
        %842 = vmatprep.subr.bf16.mxu0 0
        %843 = vmatpush1.bf16.msra.mxu0 0
        %844 = vmatprep.subr.bf16.mxu0 0
        %845 = vmatpush1.bf16.msra.mxu0 0
        %846 = vmatprep.subr.bf16.mxu0 0
        %847 = vmatpush1.bf16.msra.mxu0 0
        %848 = vmatprep.subr.bf16.mxu0 0
        %849 = vmatpush1.bf16.msra.mxu0 0
        %850 = vmatprep.subr.bf16.mxu0 0
        %851 = vmatpush1.bf16.msra.mxu0 0
        %852 = vmatprep.subr.bf16.mxu0 0
        %853 = vmatpush1.bf16.msra.mxu0 0
        %854 = vmatprep.mubr.bf16.mxu0 0
        %855 = vmatmul.mubr.bf16.gmra.mrb[0].mxu0 %v817
        %v856 = vpop.f32.mrb[0].mxu0
        %v857 = vadd.f32 0.0, %v856
        %v858 = vpop.f32.mrb[0].mxu0
        %v859 = vpop.f32.mrb[0].mxu0
        %v860 = vadd.f32 0.0, %v859
        %v861 = vpop.f32.mrb[0].mxu0
        %862 = vdwg.mxu0
        %v863 = vadd.f32 %v794, %v857
        %v864 = vadd.f32 %v795, %v860
        %s865 = scalar_lea.vmem %s257, 72
        %v866 = vld [vmem:[%s865] sm:$0xf]
        %v867 = vld [vmem:[%s865 + $0x4] sm:$0x3]
        %v869 = vunpack.c.l.b16 %v802
        %v870 = vpack.c.b16 %v869, %v869
        %v871 = vshrl.u32 %v810, 16
        %v873 = vshll.u32 %v810, 16
        %v875 = vrot.slane %v873, 1
        %v876 = vor.u32 %v871, %v875
        %v878 = vshll.u32 %v870, 16
        %v880 = vrot.slane %v878, 1
        %v881 = vsel %vm284, %v876, %v880
        %v884 = vunpack.c.l.b16 %v866
        %v885 = vunpack.c.l.b16 %v867
        %v886 = vpack.c.b16 %v885, %v884
        %v888 = vsel %vm302, %v881, 0
        %v891 = vsel %vm306, %v886, 0
        %893 = vmatprep.subr.bf16.mxu0 0
        %894 = vmatpush1.bf16.msra.mxu0 %v891
        %895 = vmatprep.subr.bf16.mxu0 0
        %896 = vmatpush1.bf16.msra.mxu0 0
        %897 = vmatprep.subr.bf16.mxu0 0
        %898 = vmatpush1.bf16.msra.mxu0 0
        %899 = vmatprep.subr.bf16.mxu0 0
        %900 = vmatpush1.bf16.msra.mxu0 0
        %901 = vmatprep.subr.bf16.mxu0 0
        %902 = vmatpush1.bf16.msra.mxu0 0
        %903 = vmatprep.subr.bf16.mxu0 0
        %904 = vmatpush1.bf16.msra.mxu0 0
        %905 = vmatprep.subr.bf16.mxu0 0
        %906 = vmatpush1.bf16.msra.mxu0 0
        %907 = vmatprep.subr.bf16.mxu0 0
        %908 = vmatpush1.bf16.msra.mxu0 0
        %909 = vmatprep.subr.bf16.mxu0 0
        %910 = vmatpush1.bf16.msra.mxu0 0
        %911 = vmatprep.subr.bf16.mxu0 0
        %912 = vmatpush1.bf16.msra.mxu0 0
        %913 = vmatprep.subr.bf16.mxu0 0
        %914 = vmatpush1.bf16.msra.mxu0 0
        %915 = vmatprep.subr.bf16.mxu0 0
        %916 = vmatpush1.bf16.msra.mxu0 0
        %917 = vmatprep.subr.bf16.mxu0 0
        %918 = vmatpush1.bf16.msra.mxu0 0
        %919 = vmatprep.subr.bf16.mxu0 0
        %920 = vmatpush1.bf16.msra.mxu0 0
        %921 = vmatprep.subr.bf16.mxu0 0
        %922 = vmatpush1.bf16.msra.mxu0 0
        %923 = vmatprep.subr.bf16.mxu0 0
        %924 = vmatpush1.bf16.msra.mxu0 0
        %925 = vmatprep.mubr.bf16.mxu0 0
        %926 = vmatmul.mubr.bf16.gmra.mrb[0].mxu0 %v888
        %v927 = vpop.f32.mrb[0].mxu0
        %v928 = vadd.f32 0.0, %v927
        %v929 = vpop.f32.mrb[0].mxu0
        %v930 = vpop.f32.mrb[0].mxu0
        %v931 = vadd.f32 0.0, %v930
        %v932 = vpop.f32.mrb[0].mxu0
        %933 = vdwg.mxu0
        %v934 = vadd.f32 %v863, %v928
        %v935 = vadd.f32 %v864, %v931
        %s936 = scalar_lea.vmem %s257, 80
        %v937 = vld [vmem:[%s936] sm:$0xf]
        %v938 = vld [vmem:[%s936 + $0x4] sm:$0x3]
        %v939 = vrot.slane %v810, 1
        %v940 = vrot.slane %v870, 1
        %v941 = vsel %vm405, %v939, %v940
        %v944 = vunpack.c.l.b16 %v937
        %v945 = vunpack.c.l.b16 %v938
        %v946 = vpack.c.b16 %v945, %v944
        %v948 = vsel %vm302, %v941, 0
        %v951 = vsel %vm306, %v946, 0
        %953 = vmatprep.subr.bf16.mxu0 0
        %954 = vmatpush1.bf16.msra.mxu0 %v951
        %955 = vmatprep.subr.bf16.mxu0 0
        %956 = vmatpush1.bf16.msra.mxu0 0
        %957 = vmatprep.subr.bf16.mxu0 0
        %958 = vmatpush1.bf16.msra.mxu0 0
        %959 = vmatprep.subr.bf16.mxu0 0
        %960 = vmatpush1.bf16.msra.mxu0 0
        %961 = vmatprep.subr.bf16.mxu0 0
        %962 = vmatpush1.bf16.msra.mxu0 0
        %963 = vmatprep.subr.bf16.mxu0 0
        %964 = vmatpush1.bf16.msra.mxu0 0
        %965 = vmatprep.subr.bf16.mxu0 0
        %966 = vmatpush1.bf16.msra.mxu0 0
        %967 = vmatprep.subr.bf16.mxu0 0
        %968 = vmatpush1.bf16.msra.mxu0 0
        %969 = vmatprep.subr.bf16.mxu0 0
        %970 = vmatpush1.bf16.msra.mxu0 0
        %971 = vmatprep.subr.bf16.mxu0 0
        %972 = vmatpush1.bf16.msra.mxu0 0
        %973 = vmatprep.subr.bf16.mxu0 0
        %974 = vmatpush1.bf16.msra.mxu0 0
        %975 = vmatprep.subr.bf16.mxu0 0
        %976 = vmatpush1.bf16.msra.mxu0 0
        %977 = vmatprep.subr.bf16.mxu0 0
        %978 = vmatpush1.bf16.msra.mxu0 0
        %979 = vmatprep.subr.bf16.mxu0 0
        %980 = vmatpush1.bf16.msra.mxu0 0
        %981 = vmatprep.subr.bf16.mxu0 0
        %982 = vmatpush1.bf16.msra.mxu0 0
        %983 = vmatprep.subr.bf16.mxu0 0
        %984 = vmatpush1.bf16.msra.mxu0 0
        %985 = vmatprep.mubr.bf16.mxu0 0
        %986 = vmatmul.mubr.bf16.gmra.mrb[0].mxu0 %v948
        %v987 = vpop.f32.mrb[0].mxu0
        %v988 = vadd.f32 0.0, %v987
        %v989 = vpop.f32.mrb[0].mxu0
        %v990 = vpop.f32.mrb[0].mxu0
        %v991 = vadd.f32 0.0, %v990
        %v992 = vpop.f32.mrb[0].mxu0
        %993 = vdwg.mxu0
        %v994 = vadd.f32 %v934, %v988
        %v995 = vadd.f32 %v935, %v991
        %s996 = scalar_lea.vmem %s257, 88
        %v997 = vld [vmem:[%s996] sm:$0xf]
        %v998 = vld [vmem:[%s996 + $0x4] sm:$0x3]
        %v999 = vrot.slane %v871, 1
        %v1000 = vrot.slane %v873, 2
        %v1001 = vor.u32 %v999, %v1000
        %v1002 = vshrl.u32 %v870, 16
        %v1004 = vrot.slane %v1002, 1
        %v1005 = vrot.slane %v878, 2
        %v1006 = vor.u32 %v1004, %v1005
        %v1007 = vsel %vm466, %v1001, %v1006
        %v1010 = vunpack.c.l.b16 %v997
        %v1011 = vunpack.c.l.b16 %v998
        %v1012 = vpack.c.b16 %v1011, %v1010
        %v1014 = vsel %vm302, %v1007, 0
        %v1017 = vsel %vm306, %v1012, 0
        %1019 = vmatprep.subr.bf16.mxu0 0
        %1020 = vmatpush1.bf16.msra.mxu0 %v1017
        %1021 = vmatprep.subr.bf16.mxu0 0
        %1022 = vmatpush1.bf16.msra.mxu0 0
        %1023 = vmatprep.subr.bf16.mxu0 0
        %1024 = vmatpush1.bf16.msra.mxu0 0
        %1025 = vmatprep.subr.bf16.mxu0 0
        %1026 = vmatpush1.bf16.msra.mxu0 0
        %1027 = vmatprep.subr.bf16.mxu0 0
        %1028 = vmatpush1.bf16.msra.mxu0 0
        %1029 = vmatprep.subr.bf16.mxu0 0
        %1030 = vmatpush1.bf16.msra.mxu0 0
        %1031 = vmatprep.subr.bf16.mxu0 0
        %1032 = vmatpush1.bf16.msra.mxu0 0
        %1033 = vmatprep.subr.bf16.mxu0 0
        %1034 = vmatpush1.bf16.msra.mxu0 0
        %1035 = vmatprep.subr.bf16.mxu0 0
        %1036 = vmatpush1.bf16.msra.mxu0 0
        %1037 = vmatprep.subr.bf16.mxu0 0
        %1038 = vmatpush1.bf16.msra.mxu0 0
        %1039 = vmatprep.subr.bf16.mxu0 0
        %1040 = vmatpush1.bf16.msra.mxu0 0
        %1041 = vmatprep.subr.bf16.mxu0 0
        %1042 = vmatpush1.bf16.msra.mxu0 0
        %1043 = vmatprep.subr.bf16.mxu0 0
        %1044 = vmatpush1.bf16.msra.mxu0 0
        %1045 = vmatprep.subr.bf16.mxu0 0
        %1046 = vmatpush1.bf16.msra.mxu0 0
        %1047 = vmatprep.subr.bf16.mxu0 0
        %1048 = vmatpush1.bf16.msra.mxu0 0
        %1049 = vmatprep.subr.bf16.mxu0 0
        %1050 = vmatpush1.bf16.msra.mxu0 0
        %1051 = vmatprep.mubr.bf16.mxu0 0
        %1052 = vmatmul.mubr.bf16.gmra.mrb[0].mxu0 %v1014
        %v1053 = vpop.f32.mrb[0].mxu0
        %v1054 = vadd.f32 0.0, %v1053
        %v1055 = vpop.f32.mrb[0].mxu0
        %v1056 = vpop.f32.mrb[0].mxu0
        %v1057 = vadd.f32 0.0, %v1056
        %v1058 = vpop.f32.mrb[0].mxu0
        %1059 = vdwg.mxu0
        %v1060 = vadd.f32 %v994, %v1054
        %v1061 = vadd.f32 %v995, %v1057
        %s1062 = sadd.s32 %s25, 3
        %s1063 = smul.u32 %s1062, 3
        %s1064 = smul.addr %s1063, 4
        %s1065 = scalar_lea.vmem %s253, %s1064
        %v1066 = vld [vmem:[%s1065] sm:$0xf]
        %v1067 = vld [vmem:[%s1065 + $0x4] sm:$0xf]
        %v1068 = vld [vmem:[%s1065 + $0x8] sm:$0x3]
        %s1069 = scalar_lea.vmem %s257, 96
        %v1070 = vld [vmem:[%s1069] sm:$0xf]
        %v1071 = vld [vmem:[%s1069 + $0x4] sm:$0x3]
        %v1074 = vunpack.c.l.b16 %v1066
        %v1075 = vunpack.c.l.b16 %v1067
        %v1076 = vpack.c.b16 %v1075, %v1074
        %v1079 = vunpack.c.l.b16 %v1070
        %v1080 = vunpack.c.l.b16 %v1071
        %v1081 = vpack.c.b16 %v1080, %v1079
        %v1083 = vsel %vm302, %v1076, 0
        %v1086 = vsel %vm306, %v1081, 0
        %1088 = vmatprep.subr.bf16.mxu0 0
        %1089 = vmatpush1.bf16.msra.mxu0 %v1086
        %1090 = vmatprep.subr.bf16.mxu0 0
        %1091 = vmatpush1.bf16.msra.mxu0 0
        %1092 = vmatprep.subr.bf16.mxu0 0
        %1093 = vmatpush1.bf16.msra.mxu0 0
        %1094 = vmatprep.subr.bf16.mxu0 0
        %1095 = vmatpush1.bf16.msra.mxu0 0
        %1096 = vmatprep.subr.bf16.mxu0 0
        %1097 = vmatpush1.bf16.msra.mxu0 0
        %1098 = vmatprep.subr.bf16.mxu0 0
        %1099 = vmatpush1.bf16.msra.mxu0 0
        %1100 = vmatprep.subr.bf16.mxu0 0
        %1101 = vmatpush1.bf16.msra.mxu0 0
        %1102 = vmatprep.subr.bf16.mxu0 0
        %1103 = vmatpush1.bf16.msra.mxu0 0
        %1104 = vmatprep.subr.bf16.mxu0 0
        %1105 = vmatpush1.bf16.msra.mxu0 0
        %1106 = vmatprep.subr.bf16.mxu0 0
        %1107 = vmatpush1.bf16.msra.mxu0 0
        %1108 = vmatprep.subr.bf16.mxu0 0
        %1109 = vmatpush1.bf16.msra.mxu0 0
        %1110 = vmatprep.subr.bf16.mxu0 0
        %1111 = vmatpush1.bf16.msra.mxu0 0
        %1112 = vmatprep.subr.bf16.mxu0 0
        %1113 = vmatpush1.bf16.msra.mxu0 0
        %1114 = vmatprep.subr.bf16.mxu0 0
        %1115 = vmatpush1.bf16.msra.mxu0 0
        %1116 = vmatprep.subr.bf16.mxu0 0
        %1117 = vmatpush1.bf16.msra.mxu0 0
        %1118 = vmatprep.subr.bf16.mxu0 0
        %1119 = vmatpush1.bf16.msra.mxu0 0
        %1120 = vmatprep.mubr.bf16.mxu0 0
        %1121 = vmatmul.mubr.bf16.gmra.mrb[0].mxu0 %v1083
        %v1122 = vpop.f32.mrb[0].mxu0
        %v1123 = vadd.f32 0.0, %v1122
        %v1124 = vpop.f32.mrb[0].mxu0
        %v1125 = vpop.f32.mrb[0].mxu0
        %v1126 = vadd.f32 0.0, %v1125
        %v1127 = vpop.f32.mrb[0].mxu0
        %1128 = vdwg.mxu0
        %v1129 = vadd.f32 %v1060, %v1123
        %v1130 = vadd.f32 %v1061, %v1126
        %s1131 = scalar_lea.vmem %s257, 104
        %v1132 = vld [vmem:[%s1131] sm:$0xf]
        %v1133 = vld [vmem:[%s1131 + $0x4] sm:$0x3]
        %v1135 = vunpack.c.l.b16 %v1068
        %v1136 = vpack.c.b16 %v1135, %v1135
        %v1137 = vshrl.u32 %v1076, 16
        %v1139 = vshll.u32 %v1076, 16
        %v1141 = vrot.slane %v1139, 1
        %v1142 = vor.u32 %v1137, %v1141
        %v1144 = vshll.u32 %v1136, 16
        %v1146 = vrot.slane %v1144, 1
        %v1147 = vsel %vm284, %v1142, %v1146
        %v1150 = vunpack.c.l.b16 %v1132
        %v1151 = vunpack.c.l.b16 %v1133
        %v1152 = vpack.c.b16 %v1151, %v1150
        %v1154 = vsel %vm302, %v1147, 0
        %v1157 = vsel %vm306, %v1152, 0
        %1159 = vmatprep.subr.bf16.mxu0 0
        %1160 = vmatpush1.bf16.msra.mxu0 %v1157
        %1161 = vmatprep.subr.bf16.mxu0 0
        %1162 = vmatpush1.bf16.msra.mxu0 0
        %1163 = vmatprep.subr.bf16.mxu0 0
        %1164 = vmatpush1.bf16.msra.mxu0 0
        %1165 = vmatprep.subr.bf16.mxu0 0
        %1166 = vmatpush1.bf16.msra.mxu0 0
        %1167 = vmatprep.subr.bf16.mxu0 0
        %1168 = vmatpush1.bf16.msra.mxu0 0
        %1169 = vmatprep.subr.bf16.mxu0 0
        %1170 = vmatpush1.bf16.msra.mxu0 0
        %1171 = vmatprep.subr.bf16.mxu0 0
        %1172 = vmatpush1.bf16.msra.mxu0 0
        %1173 = vmatprep.subr.bf16.mxu0 0
        %1174 = vmatpush1.bf16.msra.mxu0 0
        %1175 = vmatprep.subr.bf16.mxu0 0
        %1176 = vmatpush1.bf16.msra.mxu0 0
        %1177 = vmatprep.subr.bf16.mxu0 0
        %1178 = vmatpush1.bf16.msra.mxu0 0
        %1179 = vmatprep.subr.bf16.mxu0 0
        %1180 = vmatpush1.bf16.msra.mxu0 0
        %1181 = vmatprep.subr.bf16.mxu0 0
        %1182 = vmatpush1.bf16.msra.mxu0 0
        %1183 = vmatprep.subr.bf16.mxu0 0
        %1184 = vmatpush1.bf16.msra.mxu0 0
        %1185 = vmatprep.subr.bf16.mxu0 0
        %1186 = vmatpush1.bf16.msra.mxu0 0
        %1187 = vmatprep.subr.bf16.mxu0 0
        %1188 = vmatpush1.bf16.msra.mxu0 0
        %1189 = vmatprep.subr.bf16.mxu0 0
        %1190 = vmatpush1.bf16.msra.mxu0 0
        %1191 = vmatprep.mubr.bf16.mxu0 0
        %1192 = vmatmul.mubr.bf16.gmra.mrb[0].mxu0 %v1154
        %v1193 = vpop.f32.mrb[0].mxu0
        %v1194 = vadd.f32 0.0, %v1193
        %v1195 = vpop.f32.mrb[0].mxu0
        %v1196 = vpop.f32.mrb[0].mxu0
        %v1197 = vadd.f32 0.0, %v1196
        %v1198 = vpop.f32.mrb[0].mxu0
        %1199 = vdwg.mxu0
        %v1200 = vadd.f32 %v1129, %v1194
        %v1201 = vadd.f32 %v1130, %v1197
        %s1202 = scalar_lea.vmem %s257, 112
        %v1203 = vld [vmem:[%s1202] sm:$0xf]
        %v1204 = vld [vmem:[%s1202 + $0x4] sm:$0x3]
        %v1205 = vrot.slane %v1076, 1
        %v1206 = vrot.slane %v1136, 1
        %v1207 = vsel %vm405, %v1205, %v1206
        %v1210 = vunpack.c.l.b16 %v1203
        %v1211 = vunpack.c.l.b16 %v1204
        %v1212 = vpack.c.b16 %v1211, %v1210
        %v1214 = vsel %vm302, %v1207, 0
        %v1217 = vsel %vm306, %v1212, 0
        %1219 = vmatprep.subr.bf16.mxu0 0
        %1220 = vmatpush1.bf16.msra.mxu0 %v1217
        %1221 = vmatprep.subr.bf16.mxu0 0
        %1222 = vmatpush1.bf16.msra.mxu0 0
        %1223 = vmatprep.subr.bf16.mxu0 0
        %1224 = vmatpush1.bf16.msra.mxu0 0
        %1225 = vmatprep.subr.bf16.mxu0 0
        %1226 = vmatpush1.bf16.msra.mxu0 0
        %1227 = vmatprep.subr.bf16.mxu0 0
        %1228 = vmatpush1.bf16.msra.mxu0 0
        %1229 = vmatprep.subr.bf16.mxu0 0
        %1230 = vmatpush1.bf16.msra.mxu0 0
        %1231 = vmatprep.subr.bf16.mxu0 0
        %1232 = vmatpush1.bf16.msra.mxu0 0
        %1233 = vmatprep.subr.bf16.mxu0 0
        %1234 = vmatpush1.bf16.msra.mxu0 0
        %1235 = vmatprep.subr.bf16.mxu0 0
        %1236 = vmatpush1.bf16.msra.mxu0 0
        %1237 = vmatprep.subr.bf16.mxu0 0
        %1238 = vmatpush1.bf16.msra.mxu0 0
        %1239 = vmatprep.subr.bf16.mxu0 0
        %1240 = vmatpush1.bf16.msra.mxu0 0
        %1241 = vmatprep.subr.bf16.mxu0 0
        %1242 = vmatpush1.bf16.msra.mxu0 0
        %1243 = vmatprep.subr.bf16.mxu0 0
        %1244 = vmatpush1.bf16.msra.mxu0 0
        %1245 = vmatprep.subr.bf16.mxu0 0
        %1246 = vmatpush1.bf16.msra.mxu0 0
        %1247 = vmatprep.subr.bf16.mxu0 0
        %1248 = vmatpush1.bf16.msra.mxu0 0
        %1249 = vmatprep.subr.bf16.mxu0 0
        %1250 = vmatpush1.bf16.msra.mxu0 0
        %1251 = vmatprep.mubr.bf16.mxu0 0
        %1252 = vmatmul.mubr.bf16.gmra.mrb[0].mxu0 %v1214
        %v1253 = vpop.f32.mrb[0].mxu0
        %v1254 = vadd.f32 0.0, %v1253
        %v1255 = vpop.f32.mrb[0].mxu0
        %v1256 = vpop.f32.mrb[0].mxu0
        %v1257 = vadd.f32 0.0, %v1256
        %v1258 = vpop.f32.mrb[0].mxu0
        %1259 = vdwg.mxu0
        %v1260 = vadd.f32 %v1200, %v1254
        %v1261 = vadd.f32 %v1201, %v1257
        %s1262 = scalar_lea.vmem %s257, 120
        %v1263 = vld [vmem:[%s1262] sm:$0xf]
        %v1264 = vld [vmem:[%s1262 + $0x4] sm:$0x3]
        %v1265 = vrot.slane %v1137, 1
        %v1266 = vrot.slane %v1139, 2
        %v1267 = vor.u32 %v1265, %v1266
        %v1268 = vshrl.u32 %v1136, 16
        %v1270 = vrot.slane %v1268, 1
        %v1271 = vrot.slane %v1144, 2
        %v1272 = vor.u32 %v1270, %v1271
        %v1273 = vsel %vm466, %v1267, %v1272
        %v1276 = vunpack.c.l.b16 %v1263
        %v1277 = vunpack.c.l.b16 %v1264
        %v1278 = vpack.c.b16 %v1277, %v1276
        %v1280 = vsel %vm302, %v1273, 0
        %v1283 = vsel %vm306, %v1278, 0
        %1285 = vmatprep.subr.bf16.mxu0 0
        %1286 = vmatpush1.bf16.msra.mxu0 %v1283
        %1287 = vmatprep.subr.bf16.mxu0 0
        %1288 = vmatpush1.bf16.msra.mxu0 0
        %1289 = vmatprep.subr.bf16.mxu0 0
        %1290 = vmatpush1.bf16.msra.mxu0 0
        %1291 = vmatprep.subr.bf16.mxu0 0
        %1292 = vmatpush1.bf16.msra.mxu0 0
        %1293 = vmatprep.subr.bf16.mxu0 0
        %1294 = vmatpush1.bf16.msra.mxu0 0
        %1295 = vmatprep.subr.bf16.mxu0 0
        %1296 = vmatpush1.bf16.msra.mxu0 0
        %1297 = vmatprep.subr.bf16.mxu0 0
        %1298 = vmatpush1.bf16.msra.mxu0 0
        %1299 = vmatprep.subr.bf16.mxu0 0
        %1300 = vmatpush1.bf16.msra.mxu0 0
        %1301 = vmatprep.subr.bf16.mxu0 0
        %1302 = vmatpush1.bf16.msra.mxu0 0
        %1303 = vmatprep.subr.bf16.mxu0 0
        %1304 = vmatpush1.bf16.msra.mxu0 0
        %1305 = vmatprep.subr.bf16.mxu0 0
        %1306 = vmatpush1.bf16.msra.mxu0 0
        %1307 = vmatprep.subr.bf16.mxu0 0
        %1308 = vmatpush1.bf16.msra.mxu0 0
        %1309 = vmatprep.subr.bf16.mxu0 0
        %1310 = vmatpush1.bf16.msra.mxu0 0
        %1311 = vmatprep.subr.bf16.mxu0 0
        %1312 = vmatpush1.bf16.msra.mxu0 0
        %1313 = vmatprep.subr.bf16.mxu0 0
        %1314 = vmatpush1.bf16.msra.mxu0 0
        %1315 = vmatprep.subr.bf16.mxu0 0
        %1316 = vmatpush1.bf16.msra.mxu0 0
        %1317 = vmatprep.mubr.bf16.mxu0 0
        %1318 = vmatmul.mubr.bf16.gmra.mrb[0].mxu0 %v1280
        %v1319 = vpop.f32.mrb[0].mxu0
        %v1320 = vadd.f32 0.0, %v1319
        %v1321 = vpop.f32.mrb[0].mxu0
        %v1322 = vpop.f32.mrb[0].mxu0
        %v1323 = vadd.f32 0.0, %v1322
        %v1324 = vpop.f32.mrb[0].mxu0
        %1325 = vdwg.mxu0
        %v1326 = vadd.f32 %v1260, %v1320
        %v1327 = vadd.f32 %v1261, %v1323
        %v1328 = vld [vmem:[%s260] sm:$0x1]
        %v1330 = vlaneseq
        %v1331 = vshrl.u32 %v1330, 7
        %v1332 = vsub.s32 0, %v1331
        %v1333 = vrot.slane %v1328, %v1332
        %v1335 = vmul.f32 %v1326, %v1333
        %v1336 = vmul.f32 %v1327, %v1333
        %v1337 = vld [vmem:[%s263] sm:$0x1]
        %v1339 = vlaneseq
        %v1340 = vshrl.u32 %v1339, 7
        %v1341 = vsub.s32 0, %v1340
        %v1342 = vrot.slane %v1337, %v1341
        %v1344 = vadd.f32 %v1335, %v1342
        %v1345 = vadd.f32 %v1336, %v1342
        %v1346 = vmax.f32 %v1344, 0.0
        %v1347 = vmax.f32 %v1345, 0.0
        %v1348 = vpack.c.bf16 %v1347, %v1346
        %v1350 = vunpack.c.l.b16 %v1348
        %v1351 = vunpack.c.h.b16 %v1348
        %v1352 = vpack.c.b16 %v1350, %v1350
        %v1353 = vpack.c.b16 %v1351, %v1351
        %vm1356 = vcmask 519168
        %1357 = vst.msk [vmem:[%s248] sm:$0xf] %vm1356, %v1352
        %1358 = vst.msk [vmem:[%s248 + $0x4] sm:$0xf] %vm1356, %v1353
        %s1359 = sand.u32 %s153, 1
        %s1360 = scalar_lea.sflag [#allocation3], %s1359
        %s1361 = sand.u32 %s153, 1
        %s1362 = smul.addr %s1361, 8
        %s1363 = scalar_lea.vmem [#allocation2], %s1362
        // Predicated region
        $region37: #{_conv_tap_impl.1} parent=35 // pred_check
          %p1364 = pneg %p163
        $region38: #{_conv_tap_impl.1} parent=35 // pred_check_branch
          %1366 = sbr.rel (%p1364) target = $region40
        $region39: #{_conv_tap_impl.1} parent=35 // pred_region
          %s1368 = ssub.s32 128, 128
          %1369 = vsyncadd %s1360, %s1368
          %s1370 = smul.addr %s25, 2
          %s1371 = sadd.s32 %s24, %s1370
          %s1372 = smul.addr %s23, 32
          %s1373 = sadd.s32 %s1371, %s1372
          %s1374 = smul.addr %s1373, 64
          %s1375 = scalar_lea.hbm %s4, %s1374
          %s1376 = sshll.u32 %s1363, 4
          %s1377 = int_to_ptr.vmem [resolvable:$true] %s1376
          %1382 = dma.vmem_to_hbm [thread:$0]  %s1377, 128, %s1375, %s1360, 64, 64, 4
        $region40: #{_conv_tap_impl.1} parent=35 // pred_fallthru
          _
      $region36: #{_conv_tap_impl.1} parent=5 // pred_fallthru
        _
      %p1383 = scmp.le.s32.totalorder 2, %s13
      // Predicated region
      $region41: #{_conv_tap_impl.1} parent=5 // pred_check
        %p1384 = pneg %p1383
      $region42: #{_conv_tap_impl.1} parent=5 // pred_check_branch
        %1386 = sbr.rel (%p1384) target = $region44
      $region43: #{_conv_tap_impl.1} parent=5 // pred_region
        %s1387 = ssub.s32 %s13, 2
        // Predicated region
        $region45: #{_conv_tap_impl.1} parent=43 // pred_check
          %p1388 = pneg %p169
        $region46: #{_conv_tap_impl.1} parent=43 // pred_check_branch
          %1390 = sbr.rel (%p1388) target = $region48
        $region47: #{_conv_tap_impl.1} parent=43 // pred_region
          %s1391 = sand.u32 %s154, 1
          %s1392 = scalar_lea.sflag [#allocation3], %s1391
          %s1393 = sand.u32 %s154, 1
          %s1394 = smul.addr %s1393, 8
          %s1395 = scalar_lea.vmem [#allocation2], %s1394
          %1396 = dma.done %s1392, 128
        $region48: #{_conv_tap_impl.1} parent=43 // pred_fallthru
          _
      $region44: #{_conv_tap_impl.1} parent=5 // pred_fallthru
        _
    $region6: #{_conv_tap_impl.1} parent=1 // loop_footer
      %s17 = sadd.s32 1, %s13
    $region7: #{_conv_tap_impl.1} parent=1 // loop_footer_branch
      %12 = sbr.rel target = $region3
    $region8: #{_conv_tap_impl.1} parent=1 // loop_exit
      _
    %1397 = vsyncpa [#allocation3], 1
    %s1398 = scalar_lea.sflag [#allocation3], 1
    %1399 = vsyncpa %s1398, 1

</llo_original>
